<compile_context>
chip_gen: v7x
topology: tpu7x:2x2x1
jax: 0.10.0
libtpu: 0.0.40
codegen_flags: <defaults>
</compile_context>

<pallas_src>
import jax
import jax.numpy as jnp
from jax.experimental import pallas as pl
from jax.experimental.pallas import tpu as pltpu


def _fused_conv_subsampling_kernel(x_ref, w1_ref, b1_ref, w2_ref, b2_ref,
                                   o_ref, y1_ref):
    # x_ref : (1, T, F)      VMEM   one batch sample
    # w1_ref: (C*9,)         SMEM   conv1 weights, flat (c, ky, kx)
    # b1_ref: (C,)           SMEM
    # w2_ref: (C*C*9,)       SMEM   conv2 weights, flat (co, ci, ky, kx)
    # b2_ref: (C,)           SMEM
    # o_ref : (1, T, C*F)    VMEM   output already in the final layout
    # y1_ref: (C, T, F)      VMEM   conv1 output scratch (unpadded, aligned)
    _, T, F = x_ref.shape
    C = y1_ref.shape[0]
    f32 = jnp.float32

    # Edge-validity masks for row/col offsets in {-1, 0, +1}; hoisted once.
    row = jax.lax.broadcasted_iota(jnp.int32, (T, F), 0)
    col = jax.lax.broadcasted_iota(jnp.int32, (T, F), 1)
    row_ok = {-1: row >= 1, 0: None, 1: row < (T - 1)}
    col_ok = {-1: col >= 1, 0: None, 1: col < (F - 1)}

    def shift2d(p, oy, ox):
        """q[t, f] = p[t+oy, f+ox], zero outside the plane (3x3 'same' pad).

        Shifts go through the XLU (pltpu.roll), the boundary zeroing is one
        VPU select -- no padded scratch, no misaligned loads/stores.
        """
        q = p
        if oy != 0:
            q = pltpu.roll(q, shift=(-oy) % T, axis=0)
        if ox != 0:
            q = pltpu.roll(q, shift=(-ox) % F, axis=1)
        m = row_ok[oy]
        if col_ok[ox] is not None:
            m = col_ok[ox] if m is None else (m & col_ok[ox])
        return q if m is None else jnp.where(m, q, 0.0)

    OFFS = (-1, 0, 1)

    # ---- layer 1: Conv2d(1 -> C, 3x3, pad 1) + ReLU  (VPU stencil) --------
    # Tap-outer / channel-inner: one shifted plane live, C independent
    # accumulator chains (bias-initialized) give the VALUs co-issue room.
    x = x_ref[0].astype(f32)
    acc1 = [jnp.full((T, F), b1_ref[c], dtype=f32) for c in range(C)]
    for ky, oy in enumerate(OFFS):
        for kx, ox in enumerate(OFFS):
            tap = shift2d(x, oy, ox)
            for c in range(C):
                acc1[c] = acc1[c] + w1_ref[c * 9 + ky * 3 + kx] * tap
    for c in range(C):
        y1_ref[c] = jnp.maximum(acc1[c], 0.0)          # aligned full-plane store

    # ---- layer 2: Conv2d(C -> C, 3x3, pad 1) + ReLU  (VPU stencil) --------
    # Output channels processed in blocks of G: only G accumulators + one
    # shifted tap live at a time (bounded vreg pressure), while the G
    # independent chains break the serial accumulate latency.
    G = min(C, 4)
    for co0 in range(0, C, G):
        g = min(G, C - co0)
        acc2 = [jnp.full((T, F), b2_ref[co0 + j], dtype=f32) for j in range(g)]
        for ci in range(C):
            y_ci = y1_ref[ci]                          # cheap aligned VMEM re-load
            for ky, oy in enumerate(OFFS):
                for kx, ox in enumerate(OFFS):
                    tap = shift2d(y_ci, oy, ox)
                    for j in range(g):
                        w = w2_ref[((co0 + j) * C + ci) * 9 + ky * 3 + kx]
                        acc2[j] = acc2[j] + w * tap
        # out[t, co*F + f] = y2[co, t, f]  ==  permute(0,2,1,3).view(B,T,C*F)
        # Stream each finished channel straight into its lane slot (offsets
        # are 128-aligned when F % 128 == 0) -- no concatenate temp.
        for j in range(g):
            c0 = (co0 + j) * F
            o_ref[0, :, c0:c0 + F] = jnp.maximum(acc2[j], 0.0).astype(o_ref.dtype)


def conv_subsampling_forward(x, params):
    """ConvSubSampling.forward: x (B, T, F) -> (B, T, C*F)."""
    w1, b1, w2, b2 = params
    B, T, F = x.shape
    C = w1.shape[0]
    assert w1.shape[1] == 1, "first conv must have in_channels == 1 (unsqueeze)"

    # Pre-flatten / pre-cast parameters once; the kernel reads them as SMEM
    # scalars (tiny C -> MXU matmuls would be pointless; see TODOs above).
    w1f = w1.reshape(C * 9).astype(jnp.float32)             # (c, ky, kx)
    w2f = w2.reshape(C * C * 9).astype(jnp.float32)         # (co, ci, ky, kx)
    b1f = b1.astype(jnp.float32)
    b2f = b2.astype(jnp.float32)

    smem = pl.BlockSpec(memory_space=pltpu.MemorySpace.SMEM)

    # Explicit VMEM budget: y1 scratch + double-buffered input/output blocks,
    # with 2x headroom (default scoped limit is only 16/32 MiB).
    itemsize = x.dtype.itemsize
    step_bytes = (C * T * F * 4                 # y1 scratch (f32)
                  + 2 * T * F * itemsize        # input block, double-buffered
                  + 2 * T * C * F * itemsize)   # output block, double-buffered
    vmem_limit = int(min(max(2 * step_bytes, 16 << 20), 64 << 20))

    return pl.pallas_call(
        _fused_conv_subsampling_kernel,
        out_shape=jax.ShapeDtypeStruct((B, T, C * F), x.dtype),
        grid=(B,),
        in_specs=[
            pl.BlockSpec((1, T, F), lambda b: (b, 0, 0)),
            smem, smem, smem, smem,
        ],
        out_specs=pl.BlockSpec((1, T, C * F), lambda b: (b, 0, 0)),
        scratch_shapes=[
            pltpu.VMEM((C, T, F), jnp.float32),   # conv1 output (unpadded)
        ],
        compiler_params=pltpu.CompilerParams(
            dimension_semantics=("parallel",),
            vmem_limit_bytes=vmem_limit),
    )(x, w1f, b1f, w2f, b2f)


def init_params(key, in_channels, out_channels, kernel_size=3):
    k1, k2, k3, k4 = jax.random.split(key, 4)
    fan1 = in_channels * kernel_size * kernel_size
    fan2 = out_channels * kernel_size * kernel_size
    w1 = jax.random.uniform(k1, (out_channels, in_channels, kernel_size, kernel_size),
                            jnp.float32, -1.0, 1.0) / jnp.sqrt(fan1)
    b1 = jax.random.uniform(k2, (out_channels,), jnp.float32, -1.0, 1.0) / jnp.sqrt(fan1)
    w2 = jax.random.uniform(k3, (out_channels, out_channels, kernel_size, kernel_size),
                            jnp.float32, -1.0, 1.0) / jnp.sqrt(fan2)
    b2 = jax.random.uniform(k4, (out_channels,), jnp.float32, -1.0, 1.0) / jnp.sqrt(fan2)
    return (w1, b1, w2, b2)


def _reference_forward(x, params):
    """Pure-JAX reference (lax conv, full f32 precision) for correctness."""
    w1, b1, w2, b2 = params

    def conv_relu(z, w, b):
        out = jax.lax.conv_general_dilated(
            z, w, window_strides=(1, 1), padding=((1, 1), (1, 1)),
            dimension_numbers=("NCHW", "OIHW", "NCHW"),
            precision=jax.lax.Precision.HIGHEST)
        return jnp.maximum(out + b[None, :, None, None], 0.0)

    B, T, F = x.shape
    y = conv_relu(x[:, None, :, :], w1, b1)
    y = conv_relu(y, w2, b2)
    y = jnp.transpose(y, (0, 2, 1, 3))
    return y.reshape(B, T, -1)


if __name__ == "__main__":
    key = jax.random.PRNGKey(0)
    kx, kp = jax.random.split(key)

    # Small test shapes: batch=2, n_frames=8, fbanks=128 (lane-aligned so the
    # per-channel output stores land on 128-lane boundaries), channels 1 -> 4.
    B, T, F = 2, 8, 128
    in_channels, out_channels = 1, 4

    x = jax.random.normal(kx, (B, T, F), dtype=jnp.float32)
    params = init_params(kp, in_channels, out_channels)

    out = jax.block_until_ready(conv_subsampling_forward(x, params))
    ref = _reference_forward(x, params)

    assert out.shape == (B, T, out_channels * F), out.shape
    max_err = float(jnp.max(jnp.abs(out - ref)))
    assert max_err < 1e-4, max_err

    print("KERNEL_OK")
</pallas_src>

<mosaic_0001>
module attributes {stable_mosaic.version = 11 : i64} {
  func.func @_fused_conv_subsampling_kernel(%arg0: i32, %arg1: memref<1x8x128xf32, #tpu.memory_space<vmem>>, %arg2: memref<36xf32, #tpu.memory_space<smem>>, %arg3: memref<4xf32, #tpu.memory_space<smem>>, %arg4: memref<144xf32, #tpu.memory_space<smem>>, %arg5: memref<4xf32, #tpu.memory_space<smem>>, %arg6: memref<1x8x512xf32, #tpu.memory_space<vmem>>, %arg7: memref<4x8x128xf32, #tpu.memory_space<vmem>>) attributes {dimension_semantics = [#tpu.dimension_semantics<parallel>], iteration_bounds = array<i64: 2>, scalar_prefetch = 0 : i64, scratch_operands = 1 : i64, tpu.core_type = #tpu.core_type<tc>, window_params = [{transform_indices = @transform_0, window_bounds = array<i64: 1, 8, 128>}, {transform_indices = @transform_1, window_bounds = array<i64: 36>}, {transform_indices = @transform_2, window_bounds = array<i64: 4>}, {transform_indices = @transform_3, window_bounds = array<i64: 144>}, {transform_indices = @transform_4, window_bounds = array<i64: 4>}, {transform_indices = @transform_5, window_bounds = array<i64: 1, 8, 512>}]} {
    %0 = tpu.iota {dimensions = array<i32: 0>} : vector<8x128xi32>
    %1 = tpu.iota {dimensions = array<i32: 1>} : vector<8x128xi32>
    %c1_i32 = arith.constant 1 : i32
    %2 = vector.broadcast %c1_i32 : i32 to vector<8x128xi32>
    %3 = arith.cmpi sge, %0, %2 : vector<8x128xi32>
    %c7_i32 = arith.constant 7 : i32
    %4 = vector.broadcast %c7_i32 : i32 to vector<8x128xi32>
    %5 = arith.cmpi slt, %0, %4 : vector<8x128xi32>
    %c1_i32_0 = arith.constant 1 : i32
    %6 = vector.broadcast %c1_i32_0 : i32 to vector<8x128xi32>
    %7 = arith.cmpi sge, %1, %6 : vector<8x128xi32>
    %c127_i32 = arith.constant 127 : i32
    %8 = vector.broadcast %c127_i32 : i32 to vector<8x128xi32>
    %9 = arith.cmpi slt, %1, %8 : vector<8x128xi32>
    %c0 = arith.constant 0 : index
    %c0_1 = arith.constant 0 : index
    %c0_2 = arith.constant 0 : index
    %10 = vector.load %arg1[%c0, %c0_1, %c0_2] : memref<1x8x128xf32, #tpu.memory_space<vmem>>, vector<1x8x128xf32>
    %11 = vector.shape_cast %10 : vector<1x8x128xf32> to vector<8x128xf32>
    %c0_3 = arith.constant 0 : index
    %12 = memref.load %arg3[%c0_3] : memref<4xf32, #tpu.memory_space<smem>>
    %13 = vector.broadcast %12 : f32 to vector<8x128xf32>
    %c1 = arith.constant 1 : index
    %14 = memref.load %arg3[%c1] : memref<4xf32, #tpu.memory_space<smem>>
    %15 = vector.broadcast %14 : f32 to vector<8x128xf32>
    %c2 = arith.constant 2 : index
    %16 = memref.load %arg3[%c2] : memref<4xf32, #tpu.memory_space<smem>>
    %17 = vector.broadcast %16 : f32 to vector<8x128xf32>
    %c3 = arith.constant 3 : index
    %18 = memref.load %arg3[%c3] : memref<4xf32, #tpu.memory_space<smem>>
    %19 = vector.broadcast %18 : f32 to vector<8x128xf32>
    %c1_i32_4 = arith.constant 1 : i32
    %20 = tpu.dynamic_rotate %11 by %c1_i32_4 dim 0 : vector<8x128xf32>, i32 -> vector<8x128xf32>
    %c1_i32_5 = arith.constant 1 : i32
    %21 = tpu.dynamic_rotate %20 by %c1_i32_5 dim 1 : vector<8x128xf32>, i32 -> vector<8x128xf32>
    %22 = arith.andi %3, %7 : vector<8x128xi1>
    %cst = arith.constant 0.000000e+00 : f32
    %23 = vector.broadcast %cst : f32 to vector<8x128xf32>
    %24 = arith.select %22, %21, %23 : vector<8x128xi1>, vector<8x128xf32>
    %c0_6 = arith.constant 0 : index
    %25 = memref.load %arg2[%c0_6] : memref<36xf32, #tpu.memory_space<smem>>
    %26 = vector.broadcast %25 : f32 to vector<8x128xf32>
    %27 = arith.mulf %26, %24 : vector<8x128xf32>
    %28 = arith.addf %13, %27 : vector<8x128xf32>
    %c9 = arith.constant 9 : index
    %29 = memref.load %arg2[%c9] : memref<36xf32, #tpu.memory_space<smem>>
    %30 = vector.broadcast %29 : f32 to vector<8x128xf32>
    %31 = arith.mulf %30, %24 : vector<8x128xf32>
    %32 = arith.addf %15, %31 : vector<8x128xf32>
    %c18 = arith.constant 18 : index
    %33 = memref.load %arg2[%c18] : memref<36xf32, #tpu.memory_space<smem>>
    %34 = vector.broadcast %33 : f32 to vector<8x128xf32>
    %35 = arith.mulf %34, %24 : vector<8x128xf32>
    %36 = arith.addf %17, %35 : vector<8x128xf32>
    %c27 = arith.constant 27 : index
    %37 = memref.load %arg2[%c27] : memref<36xf32, #tpu.memory_space<smem>>
    %38 = vector.broadcast %37 : f32 to vector<8x128xf32>
    %39 = arith.mulf %38, %24 : vector<8x128xf32>
    %40 = arith.addf %19, %39 : vector<8x128xf32>
    %c1_i32_7 = arith.constant 1 : i32
    %41 = tpu.dynamic_rotate %11 by %c1_i32_7 dim 0 : vector<8x128xf32>, i32 -> vector<8x128xf32>
    %cst_8 = arith.constant 0.000000e+00 : f32
    %42 = vector.broadcast %cst_8 : f32 to vector<8x128xf32>
    %43 = arith.select %3, %41, %42 : vector<8x128xi1>, vector<8x128xf32>
    %c1_9 = arith.constant 1 : index
    %44 = memref.load %arg2[%c1_9] : memref<36xf32, #tpu.memory_space<smem>>
    %45 = vector.broadcast %44 : f32 to vector<8x128xf32>
    %46 = arith.mulf %45, %43 : vector<8x128xf32>
    %47 = arith.addf %28, %46 : vector<8x128xf32>
    %c10 = arith.constant 10 : index
    %48 = memref.load %arg2[%c10] : memref<36xf32, #tpu.memory_space<smem>>
    %49 = vector.broadcast %48 : f32 to vector<8x128xf32>
    %50 = arith.mulf %49, %43 : vector<8x128xf32>
    %51 = arith.addf %32, %50 : vector<8x128xf32>
    %c19 = arith.constant 19 : index
    %52 = memref.load %arg2[%c19] : memref<36xf32, #tpu.memory_space<smem>>
    %53 = vector.broadcast %52 : f32 to vector<8x128xf32>
    %54 = arith.mulf %53, %43 : vector<8x128xf32>
    %55 = arith.addf %36, %54 : vector<8x128xf32>
    %c28 = arith.constant 28 : index
    %56 = memref.load %arg2[%c28] : memref<36xf32, #tpu.memory_space<smem>>
    %57 = vector.broadcast %56 : f32 to vector<8x128xf32>
    %58 = arith.mulf %57, %43 : vector<8x128xf32>
    %59 = arith.addf %40, %58 : vector<8x128xf32>
    %c1_i32_10 = arith.constant 1 : i32
    %60 = tpu.dynamic_rotate %11 by %c1_i32_10 dim 0 : vector<8x128xf32>, i32 -> vector<8x128xf32>
    %c127_i32_11 = arith.constant 127 : i32
    %61 = tpu.dynamic_rotate %60 by %c127_i32_11 dim 1 : vector<8x128xf32>, i32 -> vector<8x128xf32>
    %62 = arith.andi %3, %9 : vector<8x128xi1>
    %cst_12 = arith.constant 0.000000e+00 : f32
    %63 = vector.broadcast %cst_12 : f32 to vector<8x128xf32>
    %64 = arith.select %62, %61, %63 : vector<8x128xi1>, vector<8x128xf32>
    %c2_13 = arith.constant 2 : index
    %65 = memref.load %arg2[%c2_13] : memref<36xf32, #tpu.memory_space<smem>>
    %66 = vector.broadcast %65 : f32 to vector<8x128xf32>
    %67 = arith.mulf %66, %64 : vector<8x128xf32>
    %68 = arith.addf %47, %67 : vector<8x128xf32>
    %c11 = arith.constant 11 : index
    %69 = memref.load %arg2[%c11] : memref<36xf32, #tpu.memory_space<smem>>
    %70 = vector.broadcast %69 : f32 to vector<8x128xf32>
    %71 = arith.mulf %70, %64 : vector<8x128xf32>
    %72 = arith.addf %51, %71 : vector<8x128xf32>
    %c20 = arith.constant 20 : index
    %73 = memref.load %arg2[%c20] : memref<36xf32, #tpu.memory_space<smem>>
    %74 = vector.broadcast %73 : f32 to vector<8x128xf32>
    %75 = arith.mulf %74, %64 : vector<8x128xf32>
    %76 = arith.addf %55, %75 : vector<8x128xf32>
    %c29 = arith.constant 29 : index
    %77 = memref.load %arg2[%c29] : memref<36xf32, #tpu.memory_space<smem>>
    %78 = vector.broadcast %77 : f32 to vector<8x128xf32>
    %79 = arith.mulf %78, %64 : vector<8x128xf32>
    %80 = arith.addf %59, %79 : vector<8x128xf32>
    %c1_i32_14 = arith.constant 1 : i32
    %81 = tpu.dynamic_rotate %11 by %c1_i32_14 dim 1 : vector<8x128xf32>, i32 -> vector<8x128xf32>
    %cst_15 = arith.constant 0.000000e+00 : f32
    %82 = vector.broadcast %cst_15 : f32 to vector<8x128xf32>
    %83 = arith.select %7, %81, %82 : vector<8x128xi1>, vector<8x128xf32>
    %c3_16 = arith.constant 3 : index
    %84 = memref.load %arg2[%c3_16] : memref<36xf32, #tpu.memory_space<smem>>
    %85 = vector.broadcast %84 : f32 to vector<8x128xf32>
    %86 = arith.mulf %85, %83 : vector<8x128xf32>
    %87 = arith.addf %68, %86 : vector<8x128xf32>
    %c12 = arith.constant 12 : index
    %88 = memref.load %arg2[%c12] : memref<36xf32, #tpu.memory_space<smem>>
    %89 = vector.broadcast %88 : f32 to vector<8x128xf32>
    %90 = arith.mulf %89, %83 : vector<8x128xf32>
    %91 = arith.addf %72, %90 : vector<8x128xf32>
    %c21 = arith.constant 21 : index
    %92 = memref.load %arg2[%c21] : memref<36xf32, #tpu.memory_space<smem>>
    %93 = vector.broadcast %92 : f32 to vector<8x128xf32>
    %94 = arith.mulf %93, %83 : vector<8x128xf32>
    %95 = arith.addf %76, %94 : vector<8x128xf32>
    %c30 = arith.constant 30 : index
    %96 = memref.load %arg2[%c30] : memref<36xf32, #tpu.memory_space<smem>>
    %97 = vector.broadcast %96 : f32 to vector<8x128xf32>
    %98 = arith.mulf %97, %83 : vector<8x128xf32>
    %99 = arith.addf %80, %98 : vector<8x128xf32>
    %c4 = arith.constant 4 : index
    %100 = memref.load %arg2[%c4] : memref<36xf32, #tpu.memory_space<smem>>
    %101 = vector.broadcast %100 : f32 to vector<8x128xf32>
    %102 = arith.mulf %101, %11 : vector<8x128xf32>
    %103 = arith.addf %87, %102 : vector<8x128xf32>
    %c13 = arith.constant 13 : index
    %104 = memref.load %arg2[%c13] : memref<36xf32, #tpu.memory_space<smem>>
    %105 = vector.broadcast %104 : f32 to vector<8x128xf32>
    %106 = arith.mulf %105, %11 : vector<8x128xf32>
    %107 = arith.addf %91, %106 : vector<8x128xf32>
    %c22 = arith.constant 22 : index
    %108 = memref.load %arg2[%c22] : memref<36xf32, #tpu.memory_space<smem>>
    %109 = vector.broadcast %108 : f32 to vector<8x128xf32>
    %110 = arith.mulf %109, %11 : vector<8x128xf32>
    %111 = arith.addf %95, %110 : vector<8x128xf32>
    %c31 = arith.constant 31 : index
    %112 = memref.load %arg2[%c31] : memref<36xf32, #tpu.memory_space<smem>>
    %113 = vector.broadcast %112 : f32 to vector<8x128xf32>
    %114 = arith.mulf %113, %11 : vector<8x128xf32>
    %115 = arith.addf %99, %114 : vector<8x128xf32>
    %c127_i32_17 = arith.constant 127 : i32
    %116 = tpu.dynamic_rotate %11 by %c127_i32_17 dim 1 : vector<8x128xf32>, i32 -> vector<8x128xf32>
    %cst_18 = arith.constant 0.000000e+00 : f32
    %117 = vector.broadcast %cst_18 : f32 to vector<8x128xf32>
    %118 = arith.select %9, %116, %117 : vector<8x128xi1>, vector<8x128xf32>
    %c5 = arith.constant 5 : index
    %119 = memref.load %arg2[%c5] : memref<36xf32, #tpu.memory_space<smem>>
    %120 = vector.broadcast %119 : f32 to vector<8x128xf32>
    %121 = arith.mulf %120, %118 : vector<8x128xf32>
    %122 = arith.addf %103, %121 : vector<8x128xf32>
    %c14 = arith.constant 14 : index
    %123 = memref.load %arg2[%c14] : memref<36xf32, #tpu.memory_space<smem>>
    %124 = vector.broadcast %123 : f32 to vector<8x128xf32>
    %125 = arith.mulf %124, %118 : vector<8x128xf32>
    %126 = arith.addf %107, %125 : vector<8x128xf32>
    %c23 = arith.constant 23 : index
    %127 = memref.load %arg2[%c23] : memref<36xf32, #tpu.memory_space<smem>>
    %128 = vector.broadcast %127 : f32 to vector<8x128xf32>
    %129 = arith.mulf %128, %118 : vector<8x128xf32>
    %130 = arith.addf %111, %129 : vector<8x128xf32>
    %c32 = arith.constant 32 : index
    %131 = memref.load %arg2[%c32] : memref<36xf32, #tpu.memory_space<smem>>
    %132 = vector.broadcast %131 : f32 to vector<8x128xf32>
    %133 = arith.mulf %132, %118 : vector<8x128xf32>
    %134 = arith.addf %115, %133 : vector<8x128xf32>
    %c7_i32_19 = arith.constant 7 : i32
    %135 = tpu.dynamic_rotate %11 by %c7_i32_19 dim 0 : vector<8x128xf32>, i32 -> vector<8x128xf32>
    %c1_i32_20 = arith.constant 1 : i32
    %136 = tpu.dynamic_rotate %135 by %c1_i32_20 dim 1 : vector<8x128xf32>, i32 -> vector<8x128xf32>
    %137 = arith.andi %5, %7 : vector<8x128xi1>
    %cst_21 = arith.constant 0.000000e+00 : f32
    %138 = vector.broadcast %cst_21 : f32 to vector<8x128xf32>
    %139 = arith.select %137, %136, %138 : vector<8x128xi1>, vector<8x128xf32>
    %c6 = arith.constant 6 : index
    %140 = memref.load %arg2[%c6] : memref<36xf32, #tpu.memory_space<smem>>
    %141 = vector.broadcast %140 : f32 to vector<8x128xf32>
    %142 = arith.mulf %141, %139 : vector<8x128xf32>
    %143 = arith.addf %122, %142 : vector<8x128xf32>
    %c15 = arith.constant 15 : index
    %144 = memref.load %arg2[%c15] : memref<36xf32, #tpu.memory_space<smem>>
    %145 = vector.broadcast %144 : f32 to vector<8x128xf32>
    %146 = arith.mulf %145, %139 : vector<8x128xf32>
    %147 = arith.addf %126, %146 : vector<8x128xf32>
    %c24 = arith.constant 24 : index
    %148 = memref.load %arg2[%c24] : memref<36xf32, #tpu.memory_space<smem>>
    %149 = vector.broadcast %148 : f32 to vector<8x128xf32>
    %150 = arith.mulf %149, %139 : vector<8x128xf32>
    %151 = arith.addf %130, %150 : vector<8x128xf32>
    %c33 = arith.constant 33 : index
    %152 = memref.load %arg2[%c33] : memref<36xf32, #tpu.memory_space<smem>>
    %153 = vector.broadcast %152 : f32 to vector<8x128xf32>
    %154 = arith.mulf %153, %139 : vector<8x128xf32>
    %155 = arith.addf %134, %154 : vector<8x128xf32>
    %c7_i32_22 = arith.constant 7 : i32
    %156 = tpu.dynamic_rotate %11 by %c7_i32_22 dim 0 : vector<8x128xf32>, i32 -> vector<8x128xf32>
    %cst_23 = arith.constant 0.000000e+00 : f32
    %157 = vector.broadcast %cst_23 : f32 to vector<8x128xf32>
    %158 = arith.select %5, %156, %157 : vector<8x128xi1>, vector<8x128xf32>
    %c7 = arith.constant 7 : index
    %159 = memref.load %arg2[%c7] : memref<36xf32, #tpu.memory_space<smem>>
    %160 = vector.broadcast %159 : f32 to vector<8x128xf32>
    %161 = arith.mulf %160, %158 : vector<8x128xf32>
    %162 = arith.addf %143, %161 : vector<8x128xf32>
    %c16 = arith.constant 16 : index
    %163 = memref.load %arg2[%c16] : memref<36xf32, #tpu.memory_space<smem>>
    %164 = vector.broadcast %163 : f32 to vector<8x128xf32>
    %165 = arith.mulf %164, %158 : vector<8x128xf32>
    %166 = arith.addf %147, %165 : vector<8x128xf32>
    %c25 = arith.constant 25 : index
    %167 = memref.load %arg2[%c25] : memref<36xf32, #tpu.memory_space<smem>>
    %168 = vector.broadcast %167 : f32 to vector<8x128xf32>
    %169 = arith.mulf %168, %158 : vector<8x128xf32>
    %170 = arith.addf %151, %169 : vector<8x128xf32>
    %c34 = arith.constant 34 : index
    %171 = memref.load %arg2[%c34] : memref<36xf32, #tpu.memory_space<smem>>
    %172 = vector.broadcast %171 : f32 to vector<8x128xf32>
    %173 = arith.mulf %172, %158 : vector<8x128xf32>
    %174 = arith.addf %155, %173 : vector<8x128xf32>
    %c7_i32_24 = arith.constant 7 : i32
    %175 = tpu.dynamic_rotate %11 by %c7_i32_24 dim 0 : vector<8x128xf32>, i32 -> vector<8x128xf32>
    %c127_i32_25 = arith.constant 127 : i32
    %176 = tpu.dynamic_rotate %175 by %c127_i32_25 dim 1 : vector<8x128xf32>, i32 -> vector<8x128xf32>
    %177 = arith.andi %5, %9 : vector<8x128xi1>
    %cst_26 = arith.constant 0.000000e+00 : f32
    %178 = vector.broadcast %cst_26 : f32 to vector<8x128xf32>
    %179 = arith.select %177, %176, %178 : vector<8x128xi1>, vector<8x128xf32>
    %c8 = arith.constant 8 : index
    %180 = memref.load %arg2[%c8] : memref<36xf32, #tpu.memory_space<smem>>
    %181 = vector.broadcast %180 : f32 to vector<8x128xf32>
    %182 = arith.mulf %181, %179 : vector<8x128xf32>
    %183 = arith.addf %162, %182 : vector<8x128xf32>
    %c17 = arith.constant 17 : index
    %184 = memref.load %arg2[%c17] : memref<36xf32, #tpu.memory_space<smem>>
    %185 = vector.broadcast %184 : f32 to vector<8x128xf32>
    %186 = arith.mulf %185, %179 : vector<8x128xf32>
    %187 = arith.addf %166, %186 : vector<8x128xf32>
    %c26 = arith.constant 26 : index
    %188 = memref.load %arg2[%c26] : memref<36xf32, #tpu.memory_space<smem>>
    %189 = vector.broadcast %188 : f32 to vector<8x128xf32>
    %190 = arith.mulf %189, %179 : vector<8x128xf32>
    %191 = arith.addf %170, %190 : vector<8x128xf32>
    %c35 = arith.constant 35 : index
    %192 = memref.load %arg2[%c35] : memref<36xf32, #tpu.memory_space<smem>>
    %193 = vector.broadcast %192 : f32 to vector<8x128xf32>
    %194 = arith.mulf %193, %179 : vector<8x128xf32>
    %195 = arith.addf %174, %194 : vector<8x128xf32>
    %cst_27 = arith.constant 0.000000e+00 : f32
    %196 = vector.broadcast %cst_27 : f32 to vector<8x128xf32>
    %197 = arith.maximumf %183, %196 : vector<8x128xf32>
    %c0_28 = arith.constant 0 : index
    %c0_29 = arith.constant 0 : index
    %c0_30 = arith.constant 0 : index
    %198 = vector.load %arg7[%c0_28, %c0_29, %c0_30] : memref<4x8x128xf32, #tpu.memory_space<vmem>>, vector<1x8x128xf32>
    %199 = vector.shape_cast %198 : vector<1x8x128xf32> to vector<8x128xf32>
    %200 = vector.shape_cast %197 : vector<8x128xf32> to vector<1x8x128xf32>
    tpu.vector_store %arg7[%c0_28, %c0_29, %c0_30], %200 {strides = array<i32>} : memref<4x8x128xf32, #tpu.memory_space<vmem>>, vector<1x8x128xf32>,
    %cst_31 = arith.constant 0.000000e+00 : f32
    %201 = vector.broadcast %cst_31 : f32 to vector<8x128xf32>
    %202 = arith.maximumf %187, %201 : vector<8x128xf32>
    %c1_32 = arith.constant 1 : index
    %c0_33 = arith.constant 0 : index
    %c0_34 = arith.constant 0 : index
    %203 = vector.load %arg7[%c1_32, %c0_33, %c0_34] : memref<4x8x128xf32, #tpu.memory_space<vmem>>, vector<1x8x128xf32>
    %204 = vector.shape_cast %203 : vector<1x8x128xf32> to vector<8x128xf32>
    %205 = vector.shape_cast %202 : vector<8x128xf32> to vector<1x8x128xf32>
    tpu.vector_store %arg7[%c1_32, %c0_33, %c0_34], %205 {strides = array<i32>} : memref<4x8x128xf32, #tpu.memory_space<vmem>>, vector<1x8x128xf32>,
    %cst_35 = arith.constant 0.000000e+00 : f32
    %206 = vector.broadcast %cst_35 : f32 to vector<8x128xf32>
    %207 = arith.maximumf %191, %206 : vector<8x128xf32>
    %c2_36 = arith.constant 2 : index
    %c0_37 = arith.constant 0 : index
    %c0_38 = arith.constant 0 : index
    %208 = vector.load %arg7[%c2_36, %c0_37, %c0_38] : memref<4x8x128xf32, #tpu.memory_space<vmem>>, vector<1x8x128xf32>
    %209 = vector.shape_cast %208 : vector<1x8x128xf32> to vector<8x128xf32>
    %210 = vector.shape_cast %207 : vector<8x128xf32> to vector<1x8x128xf32>
    tpu.vector_store %arg7[%c2_36, %c0_37, %c0_38], %210 {strides = array<i32>} : memref<4x8x128xf32, #tpu.memory_space<vmem>>, vector<1x8x128xf32>,
    %cst_39 = arith.constant 0.000000e+00 : f32
    %211 = vector.broadcast %cst_39 : f32 to vector<8x128xf32>
    %212 = arith.maximumf %195, %211 : vector<8x128xf32>
    %c3_40 = arith.constant 3 : index
    %c0_41 = arith.constant 0 : index
    %c0_42 = arith.constant 0 : index
    %213 = vector.load %arg7[%c3_40, %c0_41, %c0_42] : memref<4x8x128xf32, #tpu.memory_space<vmem>>, vector<1x8x128xf32>
    %214 = vector.shape_cast %213 : vector<1x8x128xf32> to vector<8x128xf32>
    %215 = vector.shape_cast %212 : vector<8x128xf32> to vector<1x8x128xf32>
    tpu.vector_store %arg7[%c3_40, %c0_41, %c0_42], %215 {strides = array<i32>} : memref<4x8x128xf32, #tpu.memory_space<vmem>>, vector<1x8x128xf32>,
    %c0_43 = arith.constant 0 : index
    %216 = memref.load %arg5[%c0_43] : memref<4xf32, #tpu.memory_space<smem>>
    %217 = vector.broadcast %216 : f32 to vector<8x128xf32>
    %c1_44 = arith.constant 1 : index
    %218 = memref.load %arg5[%c1_44] : memref<4xf32, #tpu.memory_space<smem>>
    %219 = vector.broadcast %218 : f32 to vector<8x128xf32>
    %c2_45 = arith.constant 2 : index
    %220 = memref.load %arg5[%c2_45] : memref<4xf32, #tpu.memory_space<smem>>
    %221 = vector.broadcast %220 : f32 to vector<8x128xf32>
    %c3_46 = arith.constant 3 : index
    %222 = memref.load %arg5[%c3_46] : memref<4xf32, #tpu.memory_space<smem>>
    %223 = vector.broadcast %222 : f32 to vector<8x128xf32>
    %c0_47 = arith.constant 0 : index
    %c0_48 = arith.constant 0 : index
    %c0_49 = arith.constant 0 : index
    %224 = vector.load %arg7[%c0_47, %c0_48, %c0_49] : memref<4x8x128xf32, #tpu.memory_space<vmem>>, vector<1x8x128xf32>
    %225 = vector.shape_cast %224 : vector<1x8x128xf32> to vector<8x128xf32>
    %c1_i32_50 = arith.constant 1 : i32
    %226 = tpu.dynamic_rotate %225 by %c1_i32_50 dim 0 : vector<8x128xf32>, i32 -> vector<8x128xf32>
    %c1_i32_51 = arith.constant 1 : i32
    %227 = tpu.dynamic_rotate %226 by %c1_i32_51 dim 1 : vector<8x128xf32>, i32 -> vector<8x128xf32>
    %228 = arith.andi %3, %7 : vector<8x128xi1>
    %cst_52 = arith.constant 0.000000e+00 : f32
    %229 = vector.broadcast %cst_52 : f32 to vector<8x128xf32>
    %230 = arith.select %228, %227, %229 : vector<8x128xi1>, vector<8x128xf32>
    %c0_53 = arith.constant 0 : index
    %231 = memref.load %arg4[%c0_53] : memref<144xf32, #tpu.memory_space<smem>>
    %232 = vector.broadcast %231 : f32 to vector<8x128xf32>
    %233 = arith.mulf %232, %230 : vector<8x128xf32>
    %234 = arith.addf %217, %233 : vector<8x128xf32>
    %c36 = arith.constant 36 : index
    %235 = memref.load %arg4[%c36] : memref<144xf32, #tpu.memory_space<smem>>
    %236 = vector.broadcast %235 : f32 to vector<8x128xf32>
    %237 = arith.mulf %236, %230 : vector<8x128xf32>
    %238 = arith.addf %219, %237 : vector<8x128xf32>
    %c72 = arith.constant 72 : index
    %239 = memref.load %arg4[%c72] : memref<144xf32, #tpu.memory_space<smem>>
    %240 = vector.broadcast %239 : f32 to vector<8x128xf32>
    %241 = arith.mulf %240, %230 : vector<8x128xf32>
    %242 = arith.addf %221, %241 : vector<8x128xf32>
    %c108 = arith.constant 108 : index
    %243 = memref.load %arg4[%c108] : memref<144xf32, #tpu.memory_space<smem>>
    %244 = vector.broadcast %243 : f32 to vector<8x128xf32>
    %245 = arith.mulf %244, %230 : vector<8x128xf32>
    %246 = arith.addf %223, %245 : vector<8x128xf32>
    %c1_i32_54 = arith.constant 1 : i32
    %247 = tpu.dynamic_rotate %225 by %c1_i32_54 dim 0 : vector<8x128xf32>, i32 -> vector<8x128xf32>
    %cst_55 = arith.constant 0.000000e+00 : f32
    %248 = vector.broadcast %cst_55 : f32 to vector<8x128xf32>
    %249 = arith.select %3, %247, %248 : vector<8x128xi1>, vector<8x128xf32>
    %c1_56 = arith.constant 1 : index
    %250 = memref.load %arg4[%c1_56] : memref<144xf32, #tpu.memory_space<smem>>
    %251 = vector.broadcast %250 : f32 to vector<8x128xf32>
    %252 = arith.mulf %251, %249 : vector<8x128xf32>
    %253 = arith.addf %234, %252 : vector<8x128xf32>
    %c37 = arith.constant 37 : index
    %254 = memref.load %arg4[%c37] : memref<144xf32, #tpu.memory_space<smem>>
    %255 = vector.broadcast %254 : f32 to vector<8x128xf32>
    %256 = arith.mulf %255, %249 : vector<8x128xf32>
    %257 = arith.addf %238, %256 : vector<8x128xf32>
    %c73 = arith.constant 73 : index
    %258 = memref.load %arg4[%c73] : memref<144xf32, #tpu.memory_space<smem>>
    %259 = vector.broadcast %258 : f32 to vector<8x128xf32>
    %260 = arith.mulf %259, %249 : vector<8x128xf32>
    %261 = arith.addf %242, %260 : vector<8x128xf32>
    %c109 = arith.constant 109 : index
    %262 = memref.load %arg4[%c109] : memref<144xf32, #tpu.memory_space<smem>>
    %263 = vector.broadcast %262 : f32 to vector<8x128xf32>
    %264 = arith.mulf %263, %249 : vector<8x128xf32>
    %265 = arith.addf %246, %264 : vector<8x128xf32>
    %c1_i32_57 = arith.constant 1 : i32
    %266 = tpu.dynamic_rotate %225 by %c1_i32_57 dim 0 : vector<8x128xf32>, i32 -> vector<8x128xf32>
    %c127_i32_58 = arith.constant 127 : i32
    %267 = tpu.dynamic_rotate %266 by %c127_i32_58 dim 1 : vector<8x128xf32>, i32 -> vector<8x128xf32>
    %268 = arith.andi %3, %9 : vector<8x128xi1>
    %cst_59 = arith.constant 0.000000e+00 : f32
    %269 = vector.broadcast %cst_59 : f32 to vector<8x128xf32>
    %270 = arith.select %268, %267, %269 : vector<8x128xi1>, vector<8x128xf32>
    %c2_60 = arith.constant 2 : index
    %271 = memref.load %arg4[%c2_60] : memref<144xf32, #tpu.memory_space<smem>>
    %272 = vector.broadcast %271 : f32 to vector<8x128xf32>
    %273 = arith.mulf %272, %270 : vector<8x128xf32>
    %274 = arith.addf %253, %273 : vector<8x128xf32>
    %c38 = arith.constant 38 : index
    %275 = memref.load %arg4[%c38] : memref<144xf32, #tpu.memory_space<smem>>
    %276 = vector.broadcast %275 : f32 to vector<8x128xf32>
    %277 = arith.mulf %276, %270 : vector<8x128xf32>
    %278 = arith.addf %257, %277 : vector<8x128xf32>
    %c74 = arith.constant 74 : index
    %279 = memref.load %arg4[%c74] : memref<144xf32, #tpu.memory_space<smem>>
    %280 = vector.broadcast %279 : f32 to vector<8x128xf32>
    %281 = arith.mulf %280, %270 : vector<8x128xf32>
    %282 = arith.addf %261, %281 : vector<8x128xf32>
    %c110 = arith.constant 110 : index
    %283 = memref.load %arg4[%c110] : memref<144xf32, #tpu.memory_space<smem>>
    %284 = vector.broadcast %283 : f32 to vector<8x128xf32>
    %285 = arith.mulf %284, %270 : vector<8x128xf32>
    %286 = arith.addf %265, %285 : vector<8x128xf32>
    %c1_i32_61 = arith.constant 1 : i32
    %287 = tpu.dynamic_rotate %225 by %c1_i32_61 dim 1 : vector<8x128xf32>, i32 -> vector<8x128xf32>
    %cst_62 = arith.constant 0.000000e+00 : f32
    %288 = vector.broadcast %cst_62 : f32 to vector<8x128xf32>
    %289 = arith.select %7, %287, %288 : vector<8x128xi1>, vector<8x128xf32>
    %c3_63 = arith.constant 3 : index
    %290 = memref.load %arg4[%c3_63] : memref<144xf32, #tpu.memory_space<smem>>
    %291 = vector.broadcast %290 : f32 to vector<8x128xf32>
    %292 = arith.mulf %291, %289 : vector<8x128xf32>
    %293 = arith.addf %274, %292 : vector<8x128xf32>
    %c39 = arith.constant 39 : index
    %294 = memref.load %arg4[%c39] : memref<144xf32, #tpu.memory_space<smem>>
    %295 = vector.broadcast %294 : f32 to vector<8x128xf32>
    %296 = arith.mulf %295, %289 : vector<8x128xf32>
    %297 = arith.addf %278, %296 : vector<8x128xf32>
    %c75 = arith.constant 75 : index
    %298 = memref.load %arg4[%c75] : memref<144xf32, #tpu.memory_space<smem>>
    %299 = vector.broadcast %298 : f32 to vector<8x128xf32>
    %300 = arith.mulf %299, %289 : vector<8x128xf32>
    %301 = arith.addf %282, %300 : vector<8x128xf32>
    %c111 = arith.constant 111 : index
    %302 = memref.load %arg4[%c111] : memref<144xf32, #tpu.memory_space<smem>>
    %303 = vector.broadcast %302 : f32 to vector<8x128xf32>
    %304 = arith.mulf %303, %289 : vector<8x128xf32>
    %305 = arith.addf %286, %304 : vector<8x128xf32>
    %c4_64 = arith.constant 4 : index
    %306 = memref.load %arg4[%c4_64] : memref<144xf32, #tpu.memory_space<smem>>
    %307 = vector.broadcast %306 : f32 to vector<8x128xf32>
    %308 = arith.mulf %307, %225 : vector<8x128xf32>
    %309 = arith.addf %293, %308 : vector<8x128xf32>
    %c40 = arith.constant 40 : index
    %310 = memref.load %arg4[%c40] : memref<144xf32, #tpu.memory_space<smem>>
    %311 = vector.broadcast %310 : f32 to vector<8x128xf32>
    %312 = arith.mulf %311, %225 : vector<8x128xf32>
    %313 = arith.addf %297, %312 : vector<8x128xf32>
    %c76 = arith.constant 76 : index
    %314 = memref.load %arg4[%c76] : memref<144xf32, #tpu.memory_space<smem>>
    %315 = vector.broadcast %314 : f32 to vector<8x128xf32>
    %316 = arith.mulf %315, %225 : vector<8x128xf32>
    %317 = arith.addf %301, %316 : vector<8x128xf32>
    %c112 = arith.constant 112 : index
    %318 = memref.load %arg4[%c112] : memref<144xf32, #tpu.memory_space<smem>>
    %319 = vector.broadcast %318 : f32 to vector<8x128xf32>
    %320 = arith.mulf %319, %225 : vector<8x128xf32>
    %321 = arith.addf %305, %320 : vector<8x128xf32>
    %c127_i32_65 = arith.constant 127 : i32
    %322 = tpu.dynamic_rotate %225 by %c127_i32_65 dim 1 : vector<8x128xf32>, i32 -> vector<8x128xf32>
    %cst_66 = arith.constant 0.000000e+00 : f32
    %323 = vector.broadcast %cst_66 : f32 to vector<8x128xf32>
    %324 = arith.select %9, %322, %323 : vector<8x128xi1>, vector<8x128xf32>
    %c5_67 = arith.constant 5 : index
    %325 = memref.load %arg4[%c5_67] : memref<144xf32, #tpu.memory_space<smem>>
    %326 = vector.broadcast %325 : f32 to vector<8x128xf32>
    %327 = arith.mulf %326, %324 : vector<8x128xf32>
    %328 = arith.addf %309, %327 : vector<8x128xf32>
    %c41 = arith.constant 41 : index
    %329 = memref.load %arg4[%c41] : memref<144xf32, #tpu.memory_space<smem>>
    %330 = vector.broadcast %329 : f32 to vector<8x128xf32>
    %331 = arith.mulf %330, %324 : vector<8x128xf32>
    %332 = arith.addf %313, %331 : vector<8x128xf32>
    %c77 = arith.constant 77 : index
    %333 = memref.load %arg4[%c77] : memref<144xf32, #tpu.memory_space<smem>>
    %334 = vector.broadcast %333 : f32 to vector<8x128xf32>
    %335 = arith.mulf %334, %324 : vector<8x128xf32>
    %336 = arith.addf %317, %335 : vector<8x128xf32>
    %c113 = arith.constant 113 : index
    %337 = memref.load %arg4[%c113] : memref<144xf32, #tpu.memory_space<smem>>
    %338 = vector.broadcast %337 : f32 to vector<8x128xf32>
    %339 = arith.mulf %338, %324 : vector<8x128xf32>
    %340 = arith.addf %321, %339 : vector<8x128xf32>
    %c7_i32_68 = arith.constant 7 : i32
    %341 = tpu.dynamic_rotate %225 by %c7_i32_68 dim 0 : vector<8x128xf32>, i32 -> vector<8x128xf32>
    %c1_i32_69 = arith.constant 1 : i32
    %342 = tpu.dynamic_rotate %341 by %c1_i32_69 dim 1 : vector<8x128xf32>, i32 -> vector<8x128xf32>
    %343 = arith.andi %5, %7 : vector<8x128xi1>
    %cst_70 = arith.constant 0.000000e+00 : f32
    %344 = vector.broadcast %cst_70 : f32 to vector<8x128xf32>
    %345 = arith.select %343, %342, %344 : vector<8x128xi1>, vector<8x128xf32>
    %c6_71 = arith.constant 6 : index
    %346 = memref.load %arg4[%c6_71] : memref<144xf32, #tpu.memory_space<smem>>
    %347 = vector.broadcast %346 : f32 to vector<8x128xf32>
    %348 = arith.mulf %347, %345 : vector<8x128xf32>
    %349 = arith.addf %328, %348 : vector<8x128xf32>
    %c42 = arith.constant 42 : index
    %350 = memref.load %arg4[%c42] : memref<144xf32, #tpu.memory_space<smem>>
    %351 = vector.broadcast %350 : f32 to vector<8x128xf32>
    %352 = arith.mulf %351, %345 : vector<8x128xf32>
    %353 = arith.addf %332, %352 : vector<8x128xf32>
    %c78 = arith.constant 78 : index
    %354 = memref.load %arg4[%c78] : memref<144xf32, #tpu.memory_space<smem>>
    %355 = vector.broadcast %354 : f32 to vector<8x128xf32>
    %356 = arith.mulf %355, %345 : vector<8x128xf32>
    %357 = arith.addf %336, %356 : vector<8x128xf32>
    %c114 = arith.constant 114 : index
    %358 = memref.load %arg4[%c114] : memref<144xf32, #tpu.memory_space<smem>>
    %359 = vector.broadcast %358 : f32 to vector<8x128xf32>
    %360 = arith.mulf %359, %345 : vector<8x128xf32>
    %361 = arith.addf %340, %360 : vector<8x128xf32>
    %c7_i32_72 = arith.constant 7 : i32
    %362 = tpu.dynamic_rotate %225 by %c7_i32_72 dim 0 : vector<8x128xf32>, i32 -> vector<8x128xf32>
    %cst_73 = arith.constant 0.000000e+00 : f32
    %363 = vector.broadcast %cst_73 : f32 to vector<8x128xf32>
    %364 = arith.select %5, %362, %363 : vector<8x128xi1>, vector<8x128xf32>
    %c7_74 = arith.constant 7 : index
    %365 = memref.load %arg4[%c7_74] : memref<144xf32, #tpu.memory_space<smem>>
    %366 = vector.broadcast %365 : f32 to vector<8x128xf32>
    %367 = arith.mulf %366, %364 : vector<8x128xf32>
    %368 = arith.addf %349, %367 : vector<8x128xf32>
    %c43 = arith.constant 43 : index
    %369 = memref.load %arg4[%c43] : memref<144xf32, #tpu.memory_space<smem>>
    %370 = vector.broadcast %369 : f32 to vector<8x128xf32>
    %371 = arith.mulf %370, %364 : vector<8x128xf32>
    %372 = arith.addf %353, %371 : vector<8x128xf32>
    %c79 = arith.constant 79 : index
    %373 = memref.load %arg4[%c79] : memref<144xf32, #tpu.memory_space<smem>>
    %374 = vector.broadcast %373 : f32 to vector<8x128xf32>
    %375 = arith.mulf %374, %364 : vector<8x128xf32>
    %376 = arith.addf %357, %375 : vector<8x128xf32>
    %c115 = arith.constant 115 : index
    %377 = memref.load %arg4[%c115] : memref<144xf32, #tpu.memory_space<smem>>
    %378 = vector.broadcast %377 : f32 to vector<8x128xf32>
    %379 = arith.mulf %378, %364 : vector<8x128xf32>
    %380 = arith.addf %361, %379 : vector<8x128xf32>
    %c7_i32_75 = arith.constant 7 : i32
    %381 = tpu.dynamic_rotate %225 by %c7_i32_75 dim 0 : vector<8x128xf32>, i32 -> vector<8x128xf32>
    %c127_i32_76 = arith.constant 127 : i32
    %382 = tpu.dynamic_rotate %381 by %c127_i32_76 dim 1 : vector<8x128xf32>, i32 -> vector<8x128xf32>
    %383 = arith.andi %5, %9 : vector<8x128xi1>
    %cst_77 = arith.constant 0.000000e+00 : f32
    %384 = vector.broadcast %cst_77 : f32 to vector<8x128xf32>
    %385 = arith.select %383, %382, %384 : vector<8x128xi1>, vector<8x128xf32>
    %c8_78 = arith.constant 8 : index
    %386 = memref.load %arg4[%c8_78] : memref<144xf32, #tpu.memory_space<smem>>
    %387 = vector.broadcast %386 : f32 to vector<8x128xf32>
    %388 = arith.mulf %387, %385 : vector<8x128xf32>
    %389 = arith.addf %368, %388 : vector<8x128xf32>
    %c44 = arith.constant 44 : index
    %390 = memref.load %arg4[%c44] : memref<144xf32, #tpu.memory_space<smem>>
    %391 = vector.broadcast %390 : f32 to vector<8x128xf32>
    %392 = arith.mulf %391, %385 : vector<8x128xf32>
    %393 = arith.addf %372, %392 : vector<8x128xf32>
    %c80 = arith.constant 80 : index
    %394 = memref.load %arg4[%c80] : memref<144xf32, #tpu.memory_space<smem>>
    %395 = vector.broadcast %394 : f32 to vector<8x128xf32>
    %396 = arith.mulf %395, %385 : vector<8x128xf32>
    %397 = arith.addf %376, %396 : vector<8x128xf32>
    %c116 = arith.constant 116 : index
    %398 = memref.load %arg4[%c116] : memref<144xf32, #tpu.memory_space<smem>>
    %399 = vector.broadcast %398 : f32 to vector<8x128xf32>
    %400 = arith.mulf %399, %385 : vector<8x128xf32>
    %401 = arith.addf %380, %400 : vector<8x128xf32>
    %c1_79 = arith.constant 1 : index
    %c0_80 = arith.constant 0 : index
    %c0_81 = arith.constant 0 : index
    %402 = vector.load %arg7[%c1_79, %c0_80, %c0_81] : memref<4x8x128xf32, #tpu.memory_space<vmem>>, vector<1x8x128xf32>
    %403 = vector.shape_cast %402 : vector<1x8x128xf32> to vector<8x128xf32>
    %c1_i32_82 = arith.constant 1 : i32
    %404 = tpu.dynamic_rotate %403 by %c1_i32_82 dim 0 : vector<8x128xf32>, i32 -> vector<8x128xf32>
    %c1_i32_83 = arith.constant 1 : i32
    %405 = tpu.dynamic_rotate %404 by %c1_i32_83 dim 1 : vector<8x128xf32>, i32 -> vector<8x128xf32>
    %406 = arith.andi %3, %7 : vector<8x128xi1>
    %cst_84 = arith.constant 0.000000e+00 : f32
    %407 = vector.broadcast %cst_84 : f32 to vector<8x128xf32>
    %408 = arith.select %406, %405, %407 : vector<8x128xi1>, vector<8x128xf32>
    %c9_85 = arith.constant 9 : index
    %409 = memref.load %arg4[%c9_85] : memref<144xf32, #tpu.memory_space<smem>>
    %410 = vector.broadcast %409 : f32 to vector<8x128xf32>
    %411 = arith.mulf %410, %408 : vector<8x128xf32>
    %412 = arith.addf %389, %411 : vector<8x128xf32>
    %c45 = arith.constant 45 : index
    %413 = memref.load %arg4[%c45] : memref<144xf32, #tpu.memory_space<smem>>
    %414 = vector.broadcast %413 : f32 to vector<8x128xf32>
    %415 = arith.mulf %414, %408 : vector<8x128xf32>
    %416 = arith.addf %393, %415 : vector<8x128xf32>
    %c81 = arith.constant 81 : index
    %417 = memref.load %arg4[%c81] : memref<144xf32, #tpu.memory_space<smem>>
    %418 = vector.broadcast %417 : f32 to vector<8x128xf32>
    %419 = arith.mulf %418, %408 : vector<8x128xf32>
    %420 = arith.addf %397, %419 : vector<8x128xf32>
    %c117 = arith.constant 117 : index
    %421 = memref.load %arg4[%c117] : memref<144xf32, #tpu.memory_space<smem>>
    %422 = vector.broadcast %421 : f32 to vector<8x128xf32>
    %423 = arith.mulf %422, %408 : vector<8x128xf32>
    %424 = arith.addf %401, %423 : vector<8x128xf32>
    %c1_i32_86 = arith.constant 1 : i32
    %425 = tpu.dynamic_rotate %403 by %c1_i32_86 dim 0 : vector<8x128xf32>, i32 -> vector<8x128xf32>
    %cst_87 = arith.constant 0.000000e+00 : f32
    %426 = vector.broadcast %cst_87 : f32 to vector<8x128xf32>
    %427 = arith.select %3, %425, %426 : vector<8x128xi1>, vector<8x128xf32>
    %c10_88 = arith.constant 10 : index
    %428 = memref.load %arg4[%c10_88] : memref<144xf32, #tpu.memory_space<smem>>
    %429 = vector.broadcast %428 : f32 to vector<8x128xf32>
    %430 = arith.mulf %429, %427 : vector<8x128xf32>
    %431 = arith.addf %412, %430 : vector<8x128xf32>
    %c46 = arith.constant 46 : index
    %432 = memref.load %arg4[%c46] : memref<144xf32, #tpu.memory_space<smem>>
    %433 = vector.broadcast %432 : f32 to vector<8x128xf32>
    %434 = arith.mulf %433, %427 : vector<8x128xf32>
    %435 = arith.addf %416, %434 : vector<8x128xf32>
    %c82 = arith.constant 82 : index
    %436 = memref.load %arg4[%c82] : memref<144xf32, #tpu.memory_space<smem>>
    %437 = vector.broadcast %436 : f32 to vector<8x128xf32>
    %438 = arith.mulf %437, %427 : vector<8x128xf32>
    %439 = arith.addf %420, %438 : vector<8x128xf32>
    %c118 = arith.constant 118 : index
    %440 = memref.load %arg4[%c118] : memref<144xf32, #tpu.memory_space<smem>>
    %441 = vector.broadcast %440 : f32 to vector<8x128xf32>
    %442 = arith.mulf %441, %427 : vector<8x128xf32>
    %443 = arith.addf %424, %442 : vector<8x128xf32>
    %c1_i32_89 = arith.constant 1 : i32
    %444 = tpu.dynamic_rotate %403 by %c1_i32_89 dim 0 : vector<8x128xf32>, i32 -> vector<8x128xf32>
    %c127_i32_90 = arith.constant 127 : i32
    %445 = tpu.dynamic_rotate %444 by %c127_i32_90 dim 1 : vector<8x128xf32>, i32 -> vector<8x128xf32>
    %446 = arith.andi %3, %9 : vector<8x128xi1>
    %cst_91 = arith.constant 0.000000e+00 : f32
    %447 = vector.broadcast %cst_91 : f32 to vector<8x128xf32>
    %448 = arith.select %446, %445, %447 : vector<8x128xi1>, vector<8x128xf32>
    %c11_92 = arith.constant 11 : index
    %449 = memref.load %arg4[%c11_92] : memref<144xf32, #tpu.memory_space<smem>>
    %450 = vector.broadcast %449 : f32 to vector<8x128xf32>
    %451 = arith.mulf %450, %448 : vector<8x128xf32>
    %452 = arith.addf %431, %451 : vector<8x128xf32>
    %c47 = arith.constant 47 : index
    %453 = memref.load %arg4[%c47] : memref<144xf32, #tpu.memory_space<smem>>
    %454 = vector.broadcast %453 : f32 to vector<8x128xf32>
    %455 = arith.mulf %454, %448 : vector<8x128xf32>
    %456 = arith.addf %435, %455 : vector<8x128xf32>
    %c83 = arith.constant 83 : index
    %457 = memref.load %arg4[%c83] : memref<144xf32, #tpu.memory_space<smem>>
    %458 = vector.broadcast %457 : f32 to vector<8x128xf32>
    %459 = arith.mulf %458, %448 : vector<8x128xf32>
    %460 = arith.addf %439, %459 : vector<8x128xf32>
    %c119 = arith.constant 119 : index
    %461 = memref.load %arg4[%c119] : memref<144xf32, #tpu.memory_space<smem>>
    %462 = vector.broadcast %461 : f32 to vector<8x128xf32>
    %463 = arith.mulf %462, %448 : vector<8x128xf32>
    %464 = arith.addf %443, %463 : vector<8x128xf32>
    %c1_i32_93 = arith.constant 1 : i32
    %465 = tpu.dynamic_rotate %403 by %c1_i32_93 dim 1 : vector<8x128xf32>, i32 -> vector<8x128xf32>
    %cst_94 = arith.constant 0.000000e+00 : f32
    %466 = vector.broadcast %cst_94 : f32 to vector<8x128xf32>
    %467 = arith.select %7, %465, %466 : vector<8x128xi1>, vector<8x128xf32>
    %c12_95 = arith.constant 12 : index
    %468 = memref.load %arg4[%c12_95] : memref<144xf32, #tpu.memory_space<smem>>
    %469 = vector.broadcast %468 : f32 to vector<8x128xf32>
    %470 = arith.mulf %469, %467 : vector<8x128xf32>
    %471 = arith.addf %452, %470 : vector<8x128xf32>
    %c48 = arith.constant 48 : index
    %472 = memref.load %arg4[%c48] : memref<144xf32, #tpu.memory_space<smem>>
    %473 = vector.broadcast %472 : f32 to vector<8x128xf32>
    %474 = arith.mulf %473, %467 : vector<8x128xf32>
    %475 = arith.addf %456, %474 : vector<8x128xf32>
    %c84 = arith.constant 84 : index
    %476 = memref.load %arg4[%c84] : memref<144xf32, #tpu.memory_space<smem>>
    %477 = vector.broadcast %476 : f32 to vector<8x128xf32>
    %478 = arith.mulf %477, %467 : vector<8x128xf32>
    %479 = arith.addf %460, %478 : vector<8x128xf32>
    %c120 = arith.constant 120 : index
    %480 = memref.load %arg4[%c120] : memref<144xf32, #tpu.memory_space<smem>>
    %481 = vector.broadcast %480 : f32 to vector<8x128xf32>
    %482 = arith.mulf %481, %467 : vector<8x128xf32>
    %483 = arith.addf %464, %482 : vector<8x128xf32>
    %c13_96 = arith.constant 13 : index
    %484 = memref.load %arg4[%c13_96] : memref<144xf32, #tpu.memory_space<smem>>
    %485 = vector.broadcast %484 : f32 to vector<8x128xf32>
    %486 = arith.mulf %485, %403 : vector<8x128xf32>
    %487 = arith.addf %471, %486 : vector<8x128xf32>
    %c49 = arith.constant 49 : index
    %488 = memref.load %arg4[%c49] : memref<144xf32, #tpu.memory_space<smem>>
    %489 = vector.broadcast %488 : f32 to vector<8x128xf32>
    %490 = arith.mulf %489, %403 : vector<8x128xf32>
    %491 = arith.addf %475, %490 : vector<8x128xf32>
    %c85 = arith.constant 85 : index
    %492 = memref.load %arg4[%c85] : memref<144xf32, #tpu.memory_space<smem>>
    %493 = vector.broadcast %492 : f32 to vector<8x128xf32>
    %494 = arith.mulf %493, %403 : vector<8x128xf32>
    %495 = arith.addf %479, %494 : vector<8x128xf32>
    %c121 = arith.constant 121 : index
    %496 = memref.load %arg4[%c121] : memref<144xf32, #tpu.memory_space<smem>>
    %497 = vector.broadcast %496 : f32 to vector<8x128xf32>
    %498 = arith.mulf %497, %403 : vector<8x128xf32>
    %499 = arith.addf %483, %498 : vector<8x128xf32>
    %c127_i32_97 = arith.constant 127 : i32
    %500 = tpu.dynamic_rotate %403 by %c127_i32_97 dim 1 : vector<8x128xf32>, i32 -> vector<8x128xf32>
    %cst_98 = arith.constant 0.000000e+00 : f32
    %501 = vector.broadcast %cst_98 : f32 to vector<8x128xf32>
    %502 = arith.select %9, %500, %501 : vector<8x128xi1>, vector<8x128xf32>
    %c14_99 = arith.constant 14 : index
    %503 = memref.load %arg4[%c14_99] : memref<144xf32, #tpu.memory_space<smem>>
    %504 = vector.broadcast %503 : f32 to vector<8x128xf32>
    %505 = arith.mulf %504, %502 : vector<8x128xf32>
    %506 = arith.addf %487, %505 : vector<8x128xf32>
    %c50 = arith.constant 50 : index
    %507 = memref.load %arg4[%c50] : memref<144xf32, #tpu.memory_space<smem>>
    %508 = vector.broadcast %507 : f32 to vector<8x128xf32>
    %509 = arith.mulf %508, %502 : vector<8x128xf32>
    %510 = arith.addf %491, %509 : vector<8x128xf32>
    %c86 = arith.constant 86 : index
    %511 = memref.load %arg4[%c86] : memref<144xf32, #tpu.memory_space<smem>>
    %512 = vector.broadcast %511 : f32 to vector<8x128xf32>
    %513 = arith.mulf %512, %502 : vector<8x128xf32>
    %514 = arith.addf %495, %513 : vector<8x128xf32>
    %c122 = arith.constant 122 : index
    %515 = memref.load %arg4[%c122] : memref<144xf32, #tpu.memory_space<smem>>
    %516 = vector.broadcast %515 : f32 to vector<8x128xf32>
    %517 = arith.mulf %516, %502 : vector<8x128xf32>
    %518 = arith.addf %499, %517 : vector<8x128xf32>
    %c7_i32_100 = arith.constant 7 : i32
    %519 = tpu.dynamic_rotate %403 by %c7_i32_100 dim 0 : vector<8x128xf32>, i32 -> vector<8x128xf32>
    %c1_i32_101 = arith.constant 1 : i32
    %520 = tpu.dynamic_rotate %519 by %c1_i32_101 dim 1 : vector<8x128xf32>, i32 -> vector<8x128xf32>
    %521 = arith.andi %5, %7 : vector<8x128xi1>
    %cst_102 = arith.constant 0.000000e+00 : f32
    %522 = vector.broadcast %cst_102 : f32 to vector<8x128xf32>
    %523 = arith.select %521, %520, %522 : vector<8x128xi1>, vector<8x128xf32>
    %c15_103 = arith.constant 15 : index
    %524 = memref.load %arg4[%c15_103] : memref<144xf32, #tpu.memory_space<smem>>
    %525 = vector.broadcast %524 : f32 to vector<8x128xf32>
    %526 = arith.mulf %525, %523 : vector<8x128xf32>
    %527 = arith.addf %506, %526 : vector<8x128xf32>
    %c51 = arith.constant 51 : index
    %528 = memref.load %arg4[%c51] : memref<144xf32, #tpu.memory_space<smem>>
    %529 = vector.broadcast %528 : f32 to vector<8x128xf32>
    %530 = arith.mulf %529, %523 : vector<8x128xf32>
    %531 = arith.addf %510, %530 : vector<8x128xf32>
    %c87 = arith.constant 87 : index
    %532 = memref.load %arg4[%c87] : memref<144xf32, #tpu.memory_space<smem>>
    %533 = vector.broadcast %532 : f32 to vector<8x128xf32>
    %534 = arith.mulf %533, %523 : vector<8x128xf32>
    %535 = arith.addf %514, %534 : vector<8x128xf32>
    %c123 = arith.constant 123 : index
    %536 = memref.load %arg4[%c123] : memref<144xf32, #tpu.memory_space<smem>>
    %537 = vector.broadcast %536 : f32 to vector<8x128xf32>
    %538 = arith.mulf %537, %523 : vector<8x128xf32>
    %539 = arith.addf %518, %538 : vector<8x128xf32>
    %c7_i32_104 = arith.constant 7 : i32
    %540 = tpu.dynamic_rotate %403 by %c7_i32_104 dim 0 : vector<8x128xf32>, i32 -> vector<8x128xf32>
    %cst_105 = arith.constant 0.000000e+00 : f32
    %541 = vector.broadcast %cst_105 : f32 to vector<8x128xf32>
    %542 = arith.select %5, %540, %541 : vector<8x128xi1>, vector<8x128xf32>
    %c16_106 = arith.constant 16 : index
    %543 = memref.load %arg4[%c16_106] : memref<144xf32, #tpu.memory_space<smem>>
    %544 = vector.broadcast %543 : f32 to vector<8x128xf32>
    %545 = arith.mulf %544, %542 : vector<8x128xf32>
    %546 = arith.addf %527, %545 : vector<8x128xf32>
    %c52 = arith.constant 52 : index
    %547 = memref.load %arg4[%c52] : memref<144xf32, #tpu.memory_space<smem>>
    %548 = vector.broadcast %547 : f32 to vector<8x128xf32>
    %549 = arith.mulf %548, %542 : vector<8x128xf32>
    %550 = arith.addf %531, %549 : vector<8x128xf32>
    %c88 = arith.constant 88 : index
    %551 = memref.load %arg4[%c88] : memref<144xf32, #tpu.memory_space<smem>>
    %552 = vector.broadcast %551 : f32 to vector<8x128xf32>
    %553 = arith.mulf %552, %542 : vector<8x128xf32>
    %554 = arith.addf %535, %553 : vector<8x128xf32>
    %c124 = arith.constant 124 : index
    %555 = memref.load %arg4[%c124] : memref<144xf32, #tpu.memory_space<smem>>
    %556 = vector.broadcast %555 : f32 to vector<8x128xf32>
    %557 = arith.mulf %556, %542 : vector<8x128xf32>
    %558 = arith.addf %539, %557 : vector<8x128xf32>
    %c7_i32_107 = arith.constant 7 : i32
    %559 = tpu.dynamic_rotate %403 by %c7_i32_107 dim 0 : vector<8x128xf32>, i32 -> vector<8x128xf32>
    %c127_i32_108 = arith.constant 127 : i32
    %560 = tpu.dynamic_rotate %559 by %c127_i32_108 dim 1 : vector<8x128xf32>, i32 -> vector<8x128xf32>
    %561 = arith.andi %5, %9 : vector<8x128xi1>
    %cst_109 = arith.constant 0.000000e+00 : f32
    %562 = vector.broadcast %cst_109 : f32 to vector<8x128xf32>
    %563 = arith.select %561, %560, %562 : vector<8x128xi1>, vector<8x128xf32>
    %c17_110 = arith.constant 17 : index
    %564 = memref.load %arg4[%c17_110] : memref<144xf32, #tpu.memory_space<smem>>
    %565 = vector.broadcast %564 : f32 to vector<8x128xf32>
    %566 = arith.mulf %565, %563 : vector<8x128xf32>
    %567 = arith.addf %546, %566 : vector<8x128xf32>
    %c53 = arith.constant 53 : index
    %568 = memref.load %arg4[%c53] : memref<144xf32, #tpu.memory_space<smem>>
    %569 = vector.broadcast %568 : f32 to vector<8x128xf32>
    %570 = arith.mulf %569, %563 : vector<8x128xf32>
    %571 = arith.addf %550, %570 : vector<8x128xf32>
    %c89 = arith.constant 89 : index
    %572 = memref.load %arg4[%c89] : memref<144xf32, #tpu.memory_space<smem>>
    %573 = vector.broadcast %572 : f32 to vector<8x128xf32>
    %574 = arith.mulf %573, %563 : vector<8x128xf32>
    %575 = arith.addf %554, %574 : vector<8x128xf32>
    %c125 = arith.constant 125 : index
    %576 = memref.load %arg4[%c125] : memref<144xf32, #tpu.memory_space<smem>>
    %577 = vector.broadcast %576 : f32 to vector<8x128xf32>
    %578 = arith.mulf %577, %563 : vector<8x128xf32>
    %579 = arith.addf %558, %578 : vector<8x128xf32>
    %c2_111 = arith.constant 2 : index
    %c0_112 = arith.constant 0 : index
    %c0_113 = arith.constant 0 : index
    %580 = vector.load %arg7[%c2_111, %c0_112, %c0_113] : memref<4x8x128xf32, #tpu.memory_space<vmem>>, vector<1x8x128xf32>
    %581 = vector.shape_cast %580 : vector<1x8x128xf32> to vector<8x128xf32>
    %c1_i32_114 = arith.constant 1 : i32
    %582 = tpu.dynamic_rotate %581 by %c1_i32_114 dim 0 : vector<8x128xf32>, i32 -> vector<8x128xf32>
    %c1_i32_115 = arith.constant 1 : i32
    %583 = tpu.dynamic_rotate %582 by %c1_i32_115 dim 1 : vector<8x128xf32>, i32 -> vector<8x128xf32>
    %584 = arith.andi %3, %7 : vector<8x128xi1>
    %cst_116 = arith.constant 0.000000e+00 : f32
    %585 = vector.broadcast %cst_116 : f32 to vector<8x128xf32>
    %586 = arith.select %584, %583, %585 : vector<8x128xi1>, vector<8x128xf32>
    %c18_117 = arith.constant 18 : index
    %587 = memref.load %arg4[%c18_117] : memref<144xf32, #tpu.memory_space<smem>>
    %588 = vector.broadcast %587 : f32 to vector<8x128xf32>
    %589 = arith.mulf %588, %586 : vector<8x128xf32>
    %590 = arith.addf %567, %589 : vector<8x128xf32>
    %c54 = arith.constant 54 : index
    %591 = memref.load %arg4[%c54] : memref<144xf32, #tpu.memory_space<smem>>
    %592 = vector.broadcast %591 : f32 to vector<8x128xf32>
    %593 = arith.mulf %592, %586 : vector<8x128xf32>
    %594 = arith.addf %571, %593 : vector<8x128xf32>
    %c90 = arith.constant 90 : index
    %595 = memref.load %arg4[%c90] : memref<144xf32, #tpu.memory_space<smem>>
    %596 = vector.broadcast %595 : f32 to vector<8x128xf32>
    %597 = arith.mulf %596, %586 : vector<8x128xf32>
    %598 = arith.addf %575, %597 : vector<8x128xf32>
    %c126 = arith.constant 126 : index
    %599 = memref.load %arg4[%c126] : memref<144xf32, #tpu.memory_space<smem>>
    %600 = vector.broadcast %599 : f32 to vector<8x128xf32>
    %601 = arith.mulf %600, %586 : vector<8x128xf32>
    %602 = arith.addf %579, %601 : vector<8x128xf32>
    %c1_i32_118 = arith.constant 1 : i32
    %603 = tpu.dynamic_rotate %581 by %c1_i32_118 dim 0 : vector<8x128xf32>, i32 -> vector<8x128xf32>
    %cst_119 = arith.constant 0.000000e+00 : f32
    %604 = vector.broadcast %cst_119 : f32 to vector<8x128xf32>
    %605 = arith.select %3, %603, %604 : vector<8x128xi1>, vector<8x128xf32>
    %c19_120 = arith.constant 19 : index
    %606 = memref.load %arg4[%c19_120] : memref<144xf32, #tpu.memory_space<smem>>
    %607 = vector.broadcast %606 : f32 to vector<8x128xf32>
    %608 = arith.mulf %607, %605 : vector<8x128xf32>
    %609 = arith.addf %590, %608 : vector<8x128xf32>
    %c55 = arith.constant 55 : index
    %610 = memref.load %arg4[%c55] : memref<144xf32, #tpu.memory_space<smem>>
    %611 = vector.broadcast %610 : f32 to vector<8x128xf32>
    %612 = arith.mulf %611, %605 : vector<8x128xf32>
    %613 = arith.addf %594, %612 : vector<8x128xf32>
    %c91 = arith.constant 91 : index
    %614 = memref.load %arg4[%c91] : memref<144xf32, #tpu.memory_space<smem>>
    %615 = vector.broadcast %614 : f32 to vector<8x128xf32>
    %616 = arith.mulf %615, %605 : vector<8x128xf32>
    %617 = arith.addf %598, %616 : vector<8x128xf32>
    %c127 = arith.constant 127 : index
    %618 = memref.load %arg4[%c127] : memref<144xf32, #tpu.memory_space<smem>>
    %619 = vector.broadcast %618 : f32 to vector<8x128xf32>
    %620 = arith.mulf %619, %605 : vector<8x128xf32>
    %621 = arith.addf %602, %620 : vector<8x128xf32>
    %c1_i32_121 = arith.constant 1 : i32
    %622 = tpu.dynamic_rotate %581 by %c1_i32_121 dim 0 : vector<8x128xf32>, i32 -> vector<8x128xf32>
    %c127_i32_122 = arith.constant 127 : i32
    %623 = tpu.dynamic_rotate %622 by %c127_i32_122 dim 1 : vector<8x128xf32>, i32 -> vector<8x128xf32>
    %624 = arith.andi %3, %9 : vector<8x128xi1>
    %cst_123 = arith.constant 0.000000e+00 : f32
    %625 = vector.broadcast %cst_123 : f32 to vector<8x128xf32>
    %626 = arith.select %624, %623, %625 : vector<8x128xi1>, vector<8x128xf32>
    %c20_124 = arith.constant 20 : index
    %627 = memref.load %arg4[%c20_124] : memref<144xf32, #tpu.memory_space<smem>>
    %628 = vector.broadcast %627 : f32 to vector<8x128xf32>
    %629 = arith.mulf %628, %626 : vector<8x128xf32>
    %630 = arith.addf %609, %629 : vector<8x128xf32>
    %c56 = arith.constant 56 : index
    %631 = memref.load %arg4[%c56] : memref<144xf32, #tpu.memory_space<smem>>
    %632 = vector.broadcast %631 : f32 to vector<8x128xf32>
    %633 = arith.mulf %632, %626 : vector<8x128xf32>
    %634 = arith.addf %613, %633 : vector<8x128xf32>
    %c92 = arith.constant 92 : index
    %635 = memref.load %arg4[%c92] : memref<144xf32, #tpu.memory_space<smem>>
    %636 = vector.broadcast %635 : f32 to vector<8x128xf32>
    %637 = arith.mulf %636, %626 : vector<8x128xf32>
    %638 = arith.addf %617, %637 : vector<8x128xf32>
    %c128 = arith.constant 128 : index
    %639 = memref.load %arg4[%c128] : memref<144xf32, #tpu.memory_space<smem>>
    %640 = vector.broadcast %639 : f32 to vector<8x128xf32>
    %641 = arith.mulf %640, %626 : vector<8x128xf32>
    %642 = arith.addf %621, %641 : vector<8x128xf32>
    %c1_i32_125 = arith.constant 1 : i32
    %643 = tpu.dynamic_rotate %581 by %c1_i32_125 dim 1 : vector<8x128xf32>, i32 -> vector<8x128xf32>
    %cst_126 = arith.constant 0.000000e+00 : f32
    %644 = vector.broadcast %cst_126 : f32 to vector<8x128xf32>
    %645 = arith.select %7, %643, %644 : vector<8x128xi1>, vector<8x128xf32>
    %c21_127 = arith.constant 21 : index
    %646 = memref.load %arg4[%c21_127] : memref<144xf32, #tpu.memory_space<smem>>
    %647 = vector.broadcast %646 : f32 to vector<8x128xf32>
    %648 = arith.mulf %647, %645 : vector<8x128xf32>
    %649 = arith.addf %630, %648 : vector<8x128xf32>
    %c57 = arith.constant 57 : index
    %650 = memref.load %arg4[%c57] : memref<144xf32, #tpu.memory_space<smem>>
    %651 = vector.broadcast %650 : f32 to vector<8x128xf32>
    %652 = arith.mulf %651, %645 : vector<8x128xf32>
    %653 = arith.addf %634, %652 : vector<8x128xf32>
    %c93 = arith.constant 93 : index
    %654 = memref.load %arg4[%c93] : memref<144xf32, #tpu.memory_space<smem>>
    %655 = vector.broadcast %654 : f32 to vector<8x128xf32>
    %656 = arith.mulf %655, %645 : vector<8x128xf32>
    %657 = arith.addf %638, %656 : vector<8x128xf32>
    %c129 = arith.constant 129 : index
    %658 = memref.load %arg4[%c129] : memref<144xf32, #tpu.memory_space<smem>>
    %659 = vector.broadcast %658 : f32 to vector<8x128xf32>
    %660 = arith.mulf %659, %645 : vector<8x128xf32>
    %661 = arith.addf %642, %660 : vector<8x128xf32>
    %c22_128 = arith.constant 22 : index
    %662 = memref.load %arg4[%c22_128] : memref<144xf32, #tpu.memory_space<smem>>
    %663 = vector.broadcast %662 : f32 to vector<8x128xf32>
    %664 = arith.mulf %663, %581 : vector<8x128xf32>
    %665 = arith.addf %649, %664 : vector<8x128xf32>
    %c58 = arith.constant 58 : index
    %666 = memref.load %arg4[%c58] : memref<144xf32, #tpu.memory_space<smem>>
    %667 = vector.broadcast %666 : f32 to vector<8x128xf32>
    %668 = arith.mulf %667, %581 : vector<8x128xf32>
    %669 = arith.addf %653, %668 : vector<8x128xf32>
    %c94 = arith.constant 94 : index
    %670 = memref.load %arg4[%c94] : memref<144xf32, #tpu.memory_space<smem>>
    %671 = vector.broadcast %670 : f32 to vector<8x128xf32>
    %672 = arith.mulf %671, %581 : vector<8x128xf32>
    %673 = arith.addf %657, %672 : vector<8x128xf32>
    %c130 = arith.constant 130 : index
    %674 = memref.load %arg4[%c130] : memref<144xf32, #tpu.memory_space<smem>>
    %675 = vector.broadcast %674 : f32 to vector<8x128xf32>
    %676 = arith.mulf %675, %581 : vector<8x128xf32>
    %677 = arith.addf %661, %676 : vector<8x128xf32>
    %c127_i32_129 = arith.constant 127 : i32
    %678 = tpu.dynamic_rotate %581 by %c127_i32_129 dim 1 : vector<8x128xf32>, i32 -> vector<8x128xf32>
    %cst_130 = arith.constant 0.000000e+00 : f32
    %679 = vector.broadcast %cst_130 : f32 to vector<8x128xf32>
    %680 = arith.select %9, %678, %679 : vector<8x128xi1>, vector<8x128xf32>
    %c23_131 = arith.constant 23 : index
    %681 = memref.load %arg4[%c23_131] : memref<144xf32, #tpu.memory_space<smem>>
    %682 = vector.broadcast %681 : f32 to vector<8x128xf32>
    %683 = arith.mulf %682, %680 : vector<8x128xf32>
    %684 = arith.addf %665, %683 : vector<8x128xf32>
    %c59 = arith.constant 59 : index
    %685 = memref.load %arg4[%c59] : memref<144xf32, #tpu.memory_space<smem>>
    %686 = vector.broadcast %685 : f32 to vector<8x128xf32>
    %687 = arith.mulf %686, %680 : vector<8x128xf32>
    %688 = arith.addf %669, %687 : vector<8x128xf32>
    %c95 = arith.constant 95 : index
    %689 = memref.load %arg4[%c95] : memref<144xf32, #tpu.memory_space<smem>>
    %690 = vector.broadcast %689 : f32 to vector<8x128xf32>
    %691 = arith.mulf %690, %680 : vector<8x128xf32>
    %692 = arith.addf %673, %691 : vector<8x128xf32>
    %c131 = arith.constant 131 : index
    %693 = memref.load %arg4[%c131] : memref<144xf32, #tpu.memory_space<smem>>
    %694 = vector.broadcast %693 : f32 to vector<8x128xf32>
    %695 = arith.mulf %694, %680 : vector<8x128xf32>
    %696 = arith.addf %677, %695 : vector<8x128xf32>
    %c7_i32_132 = arith.constant 7 : i32
    %697 = tpu.dynamic_rotate %581 by %c7_i32_132 dim 0 : vector<8x128xf32>, i32 -> vector<8x128xf32>
    %c1_i32_133 = arith.constant 1 : i32
    %698 = tpu.dynamic_rotate %697 by %c1_i32_133 dim 1 : vector<8x128xf32>, i32 -> vector<8x128xf32>
    %699 = arith.andi %5, %7 : vector<8x128xi1>
    %cst_134 = arith.constant 0.000000e+00 : f32
    %700 = vector.broadcast %cst_134 : f32 to vector<8x128xf32>
    %701 = arith.select %699, %698, %700 : vector<8x128xi1>, vector<8x128xf32>
    %c24_135 = arith.constant 24 : index
    %702 = memref.load %arg4[%c24_135] : memref<144xf32, #tpu.memory_space<smem>>
    %703 = vector.broadcast %702 : f32 to vector<8x128xf32>
    %704 = arith.mulf %703, %701 : vector<8x128xf32>
    %705 = arith.addf %684, %704 : vector<8x128xf32>
    %c60 = arith.constant 60 : index
    %706 = memref.load %arg4[%c60] : memref<144xf32, #tpu.memory_space<smem>>
    %707 = vector.broadcast %706 : f32 to vector<8x128xf32>
    %708 = arith.mulf %707, %701 : vector<8x128xf32>
    %709 = arith.addf %688, %708 : vector<8x128xf32>
    %c96 = arith.constant 96 : index
    %710 = memref.load %arg4[%c96] : memref<144xf32, #tpu.memory_space<smem>>
    %711 = vector.broadcast %710 : f32 to vector<8x128xf32>
    %712 = arith.mulf %711, %701 : vector<8x128xf32>
    %713 = arith.addf %692, %712 : vector<8x128xf32>
    %c132 = arith.constant 132 : index
    %714 = memref.load %arg4[%c132] : memref<144xf32, #tpu.memory_space<smem>>
    %715 = vector.broadcast %714 : f32 to vector<8x128xf32>
    %716 = arith.mulf %715, %701 : vector<8x128xf32>
    %717 = arith.addf %696, %716 : vector<8x128xf32>
    %c7_i32_136 = arith.constant 7 : i32
    %718 = tpu.dynamic_rotate %581 by %c7_i32_136 dim 0 : vector<8x128xf32>, i32 -> vector<8x128xf32>
    %cst_137 = arith.constant 0.000000e+00 : f32
    %719 = vector.broadcast %cst_137 : f32 to vector<8x128xf32>
    %720 = arith.select %5, %718, %719 : vector<8x128xi1>, vector<8x128xf32>
    %c25_138 = arith.constant 25 : index
    %721 = memref.load %arg4[%c25_138] : memref<144xf32, #tpu.memory_space<smem>>
    %722 = vector.broadcast %721 : f32 to vector<8x128xf32>
    %723 = arith.mulf %722, %720 : vector<8x128xf32>
    %724 = arith.addf %705, %723 : vector<8x128xf32>
    %c61 = arith.constant 61 : index
    %725 = memref.load %arg4[%c61] : memref<144xf32, #tpu.memory_space<smem>>
    %726 = vector.broadcast %725 : f32 to vector<8x128xf32>
    %727 = arith.mulf %726, %720 : vector<8x128xf32>
    %728 = arith.addf %709, %727 : vector<8x128xf32>
    %c97 = arith.constant 97 : index
    %729 = memref.load %arg4[%c97] : memref<144xf32, #tpu.memory_space<smem>>
    %730 = vector.broadcast %729 : f32 to vector<8x128xf32>
    %731 = arith.mulf %730, %720 : vector<8x128xf32>
    %732 = arith.addf %713, %731 : vector<8x128xf32>
    %c133 = arith.constant 133 : index
    %733 = memref.load %arg4[%c133] : memref<144xf32, #tpu.memory_space<smem>>
    %734 = vector.broadcast %733 : f32 to vector<8x128xf32>
    %735 = arith.mulf %734, %720 : vector<8x128xf32>
    %736 = arith.addf %717, %735 : vector<8x128xf32>
    %c7_i32_139 = arith.constant 7 : i32
    %737 = tpu.dynamic_rotate %581 by %c7_i32_139 dim 0 : vector<8x128xf32>, i32 -> vector<8x128xf32>
    %c127_i32_140 = arith.constant 127 : i32
    %738 = tpu.dynamic_rotate %737 by %c127_i32_140 dim 1 : vector<8x128xf32>, i32 -> vector<8x128xf32>
    %739 = arith.andi %5, %9 : vector<8x128xi1>
    %cst_141 = arith.constant 0.000000e+00 : f32
    %740 = vector.broadcast %cst_141 : f32 to vector<8x128xf32>
    %741 = arith.select %739, %738, %740 : vector<8x128xi1>, vector<8x128xf32>
    %c26_142 = arith.constant 26 : index
    %742 = memref.load %arg4[%c26_142] : memref<144xf32, #tpu.memory_space<smem>>
    %743 = vector.broadcast %742 : f32 to vector<8x128xf32>
    %744 = arith.mulf %743, %741 : vector<8x128xf32>
    %745 = arith.addf %724, %744 : vector<8x128xf32>
    %c62 = arith.constant 62 : index
    %746 = memref.load %arg4[%c62] : memref<144xf32, #tpu.memory_space<smem>>
    %747 = vector.broadcast %746 : f32 to vector<8x128xf32>
    %748 = arith.mulf %747, %741 : vector<8x128xf32>
    %749 = arith.addf %728, %748 : vector<8x128xf32>
    %c98 = arith.constant 98 : index
    %750 = memref.load %arg4[%c98] : memref<144xf32, #tpu.memory_space<smem>>
    %751 = vector.broadcast %750 : f32 to vector<8x128xf32>
    %752 = arith.mulf %751, %741 : vector<8x128xf32>
    %753 = arith.addf %732, %752 : vector<8x128xf32>
    %c134 = arith.constant 134 : index
    %754 = memref.load %arg4[%c134] : memref<144xf32, #tpu.memory_space<smem>>
    %755 = vector.broadcast %754 : f32 to vector<8x128xf32>
    %756 = arith.mulf %755, %741 : vector<8x128xf32>
    %757 = arith.addf %736, %756 : vector<8x128xf32>
    %c3_143 = arith.constant 3 : index
    %c0_144 = arith.constant 0 : index
    %c0_145 = arith.constant 0 : index
    %758 = vector.load %arg7[%c3_143, %c0_144, %c0_145] : memref<4x8x128xf32, #tpu.memory_space<vmem>>, vector<1x8x128xf32>
    %759 = vector.shape_cast %758 : vector<1x8x128xf32> to vector<8x128xf32>
    %c1_i32_146 = arith.constant 1 : i32
    %760 = tpu.dynamic_rotate %759 by %c1_i32_146 dim 0 : vector<8x128xf32>, i32 -> vector<8x128xf32>
    %c1_i32_147 = arith.constant 1 : i32
    %761 = tpu.dynamic_rotate %760 by %c1_i32_147 dim 1 : vector<8x128xf32>, i32 -> vector<8x128xf32>
    %762 = arith.andi %3, %7 : vector<8x128xi1>
    %cst_148 = arith.constant 0.000000e+00 : f32
    %763 = vector.broadcast %cst_148 : f32 to vector<8x128xf32>
    %764 = arith.select %762, %761, %763 : vector<8x128xi1>, vector<8x128xf32>
    %c27_149 = arith.constant 27 : index
    %765 = memref.load %arg4[%c27_149] : memref<144xf32, #tpu.memory_space<smem>>
    %766 = vector.broadcast %765 : f32 to vector<8x128xf32>
    %767 = arith.mulf %766, %764 : vector<8x128xf32>
    %768 = arith.addf %745, %767 : vector<8x128xf32>
    %c63 = arith.constant 63 : index
    %769 = memref.load %arg4[%c63] : memref<144xf32, #tpu.memory_space<smem>>
    %770 = vector.broadcast %769 : f32 to vector<8x128xf32>
    %771 = arith.mulf %770, %764 : vector<8x128xf32>
    %772 = arith.addf %749, %771 : vector<8x128xf32>
    %c99 = arith.constant 99 : index
    %773 = memref.load %arg4[%c99] : memref<144xf32, #tpu.memory_space<smem>>
    %774 = vector.broadcast %773 : f32 to vector<8x128xf32>
    %775 = arith.mulf %774, %764 : vector<8x128xf32>
    %776 = arith.addf %753, %775 : vector<8x128xf32>
    %c135 = arith.constant 135 : index
    %777 = memref.load %arg4[%c135] : memref<144xf32, #tpu.memory_space<smem>>
    %778 = vector.broadcast %777 : f32 to vector<8x128xf32>
    %779 = arith.mulf %778, %764 : vector<8x128xf32>
    %780 = arith.addf %757, %779 : vector<8x128xf32>
    %c1_i32_150 = arith.constant 1 : i32
    %781 = tpu.dynamic_rotate %759 by %c1_i32_150 dim 0 : vector<8x128xf32>, i32 -> vector<8x128xf32>
    %cst_151 = arith.constant 0.000000e+00 : f32
    %782 = vector.broadcast %cst_151 : f32 to vector<8x128xf32>
    %783 = arith.select %3, %781, %782 : vector<8x128xi1>, vector<8x128xf32>
    %c28_152 = arith.constant 28 : index
    %784 = memref.load %arg4[%c28_152] : memref<144xf32, #tpu.memory_space<smem>>
    %785 = vector.broadcast %784 : f32 to vector<8x128xf32>
    %786 = arith.mulf %785, %783 : vector<8x128xf32>
    %787 = arith.addf %768, %786 : vector<8x128xf32>
    %c64 = arith.constant 64 : index
    %788 = memref.load %arg4[%c64] : memref<144xf32, #tpu.memory_space<smem>>
    %789 = vector.broadcast %788 : f32 to vector<8x128xf32>
    %790 = arith.mulf %789, %783 : vector<8x128xf32>
    %791 = arith.addf %772, %790 : vector<8x128xf32>
    %c100 = arith.constant 100 : index
    %792 = memref.load %arg4[%c100] : memref<144xf32, #tpu.memory_space<smem>>
    %793 = vector.broadcast %792 : f32 to vector<8x128xf32>
    %794 = arith.mulf %793, %783 : vector<8x128xf32>
    %795 = arith.addf %776, %794 : vector<8x128xf32>
    %c136 = arith.constant 136 : index
    %796 = memref.load %arg4[%c136] : memref<144xf32, #tpu.memory_space<smem>>
    %797 = vector.broadcast %796 : f32 to vector<8x128xf32>
    %798 = arith.mulf %797, %783 : vector<8x128xf32>
    %799 = arith.addf %780, %798 : vector<8x128xf32>
    %c1_i32_153 = arith.constant 1 : i32
    %800 = tpu.dynamic_rotate %759 by %c1_i32_153 dim 0 : vector<8x128xf32>, i32 -> vector<8x128xf32>
    %c127_i32_154 = arith.constant 127 : i32
    %801 = tpu.dynamic_rotate %800 by %c127_i32_154 dim 1 : vector<8x128xf32>, i32 -> vector<8x128xf32>
    %802 = arith.andi %3, %9 : vector<8x128xi1>
    %cst_155 = arith.constant 0.000000e+00 : f32
    %803 = vector.broadcast %cst_155 : f32 to vector<8x128xf32>
    %804 = arith.select %802, %801, %803 : vector<8x128xi1>, vector<8x128xf32>
    %c29_156 = arith.constant 29 : index
    %805 = memref.load %arg4[%c29_156] : memref<144xf32, #tpu.memory_space<smem>>
    %806 = vector.broadcast %805 : f32 to vector<8x128xf32>
    %807 = arith.mulf %806, %804 : vector<8x128xf32>
    %808 = arith.addf %787, %807 : vector<8x128xf32>
    %c65 = arith.constant 65 : index
    %809 = memref.load %arg4[%c65] : memref<144xf32, #tpu.memory_space<smem>>
    %810 = vector.broadcast %809 : f32 to vector<8x128xf32>
    %811 = arith.mulf %810, %804 : vector<8x128xf32>
    %812 = arith.addf %791, %811 : vector<8x128xf32>
    %c101 = arith.constant 101 : index
    %813 = memref.load %arg4[%c101] : memref<144xf32, #tpu.memory_space<smem>>
    %814 = vector.broadcast %813 : f32 to vector<8x128xf32>
    %815 = arith.mulf %814, %804 : vector<8x128xf32>
    %816 = arith.addf %795, %815 : vector<8x128xf32>
    %c137 = arith.constant 137 : index
    %817 = memref.load %arg4[%c137] : memref<144xf32, #tpu.memory_space<smem>>
    %818 = vector.broadcast %817 : f32 to vector<8x128xf32>
    %819 = arith.mulf %818, %804 : vector<8x128xf32>
    %820 = arith.addf %799, %819 : vector<8x128xf32>
    %c1_i32_157 = arith.constant 1 : i32
    %821 = tpu.dynamic_rotate %759 by %c1_i32_157 dim 1 : vector<8x128xf32>, i32 -> vector<8x128xf32>
    %cst_158 = arith.constant 0.000000e+00 : f32
    %822 = vector.broadcast %cst_158 : f32 to vector<8x128xf32>
    %823 = arith.select %7, %821, %822 : vector<8x128xi1>, vector<8x128xf32>
    %c30_159 = arith.constant 30 : index
    %824 = memref.load %arg4[%c30_159] : memref<144xf32, #tpu.memory_space<smem>>
    %825 = vector.broadcast %824 : f32 to vector<8x128xf32>
    %826 = arith.mulf %825, %823 : vector<8x128xf32>
    %827 = arith.addf %808, %826 : vector<8x128xf32>
    %c66 = arith.constant 66 : index
    %828 = memref.load %arg4[%c66] : memref<144xf32, #tpu.memory_space<smem>>
    %829 = vector.broadcast %828 : f32 to vector<8x128xf32>
    %830 = arith.mulf %829, %823 : vector<8x128xf32>
    %831 = arith.addf %812, %830 : vector<8x128xf32>
    %c102 = arith.constant 102 : index
    %832 = memref.load %arg4[%c102] : memref<144xf32, #tpu.memory_space<smem>>
    %833 = vector.broadcast %832 : f32 to vector<8x128xf32>
    %834 = arith.mulf %833, %823 : vector<8x128xf32>
    %835 = arith.addf %816, %834 : vector<8x128xf32>
    %c138 = arith.constant 138 : index
    %836 = memref.load %arg4[%c138] : memref<144xf32, #tpu.memory_space<smem>>
    %837 = vector.broadcast %836 : f32 to vector<8x128xf32>
    %838 = arith.mulf %837, %823 : vector<8x128xf32>
    %839 = arith.addf %820, %838 : vector<8x128xf32>
    %c31_160 = arith.constant 31 : index
    %840 = memref.load %arg4[%c31_160] : memref<144xf32, #tpu.memory_space<smem>>
    %841 = vector.broadcast %840 : f32 to vector<8x128xf32>
    %842 = arith.mulf %841, %759 : vector<8x128xf32>
    %843 = arith.addf %827, %842 : vector<8x128xf32>
    %c67 = arith.constant 67 : index
    %844 = memref.load %arg4[%c67] : memref<144xf32, #tpu.memory_space<smem>>
    %845 = vector.broadcast %844 : f32 to vector<8x128xf32>
    %846 = arith.mulf %845, %759 : vector<8x128xf32>
    %847 = arith.addf %831, %846 : vector<8x128xf32>
    %c103 = arith.constant 103 : index
    %848 = memref.load %arg4[%c103] : memref<144xf32, #tpu.memory_space<smem>>
    %849 = vector.broadcast %848 : f32 to vector<8x128xf32>
    %850 = arith.mulf %849, %759 : vector<8x128xf32>
    %851 = arith.addf %835, %850 : vector<8x128xf32>
    %c139 = arith.constant 139 : index
    %852 = memref.load %arg4[%c139] : memref<144xf32, #tpu.memory_space<smem>>
    %853 = vector.broadcast %852 : f32 to vector<8x128xf32>
    %854 = arith.mulf %853, %759 : vector<8x128xf32>
    %855 = arith.addf %839, %854 : vector<8x128xf32>
    %c127_i32_161 = arith.constant 127 : i32
    %856 = tpu.dynamic_rotate %759 by %c127_i32_161 dim 1 : vector<8x128xf32>, i32 -> vector<8x128xf32>
    %cst_162 = arith.constant 0.000000e+00 : f32
    %857 = vector.broadcast %cst_162 : f32 to vector<8x128xf32>
    %858 = arith.select %9, %856, %857 : vector<8x128xi1>, vector<8x128xf32>
    %c32_163 = arith.constant 32 : index
    %859 = memref.load %arg4[%c32_163] : memref<144xf32, #tpu.memory_space<smem>>
    %860 = vector.broadcast %859 : f32 to vector<8x128xf32>
    %861 = arith.mulf %860, %858 : vector<8x128xf32>
    %862 = arith.addf %843, %861 : vector<8x128xf32>
    %c68 = arith.constant 68 : index
    %863 = memref.load %arg4[%c68] : memref<144xf32, #tpu.memory_space<smem>>
    %864 = vector.broadcast %863 : f32 to vector<8x128xf32>
    %865 = arith.mulf %864, %858 : vector<8x128xf32>
    %866 = arith.addf %847, %865 : vector<8x128xf32>
    %c104 = arith.constant 104 : index
    %867 = memref.load %arg4[%c104] : memref<144xf32, #tpu.memory_space<smem>>
    %868 = vector.broadcast %867 : f32 to vector<8x128xf32>
    %869 = arith.mulf %868, %858 : vector<8x128xf32>
    %870 = arith.addf %851, %869 : vector<8x128xf32>
    %c140 = arith.constant 140 : index
    %871 = memref.load %arg4[%c140] : memref<144xf32, #tpu.memory_space<smem>>
    %872 = vector.broadcast %871 : f32 to vector<8x128xf32>
    %873 = arith.mulf %872, %858 : vector<8x128xf32>
    %874 = arith.addf %855, %873 : vector<8x128xf32>
    %c7_i32_164 = arith.constant 7 : i32
    %875 = tpu.dynamic_rotate %759 by %c7_i32_164 dim 0 : vector<8x128xf32>, i32 -> vector<8x128xf32>
    %c1_i32_165 = arith.constant 1 : i32
    %876 = tpu.dynamic_rotate %875 by %c1_i32_165 dim 1 : vector<8x128xf32>, i32 -> vector<8x128xf32>
    %877 = arith.andi %5, %7 : vector<8x128xi1>
    %cst_166 = arith.constant 0.000000e+00 : f32
    %878 = vector.broadcast %cst_166 : f32 to vector<8x128xf32>
    %879 = arith.select %877, %876, %878 : vector<8x128xi1>, vector<8x128xf32>
    %c33_167 = arith.constant 33 : index
    %880 = memref.load %arg4[%c33_167] : memref<144xf32, #tpu.memory_space<smem>>
    %881 = vector.broadcast %880 : f32 to vector<8x128xf32>
    %882 = arith.mulf %881, %879 : vector<8x128xf32>
    %883 = arith.addf %862, %882 : vector<8x128xf32>
    %c69 = arith.constant 69 : index
    %884 = memref.load %arg4[%c69] : memref<144xf32, #tpu.memory_space<smem>>
    %885 = vector.broadcast %884 : f32 to vector<8x128xf32>
    %886 = arith.mulf %885, %879 : vector<8x128xf32>
    %887 = arith.addf %866, %886 : vector<8x128xf32>
    %c105 = arith.constant 105 : index
    %888 = memref.load %arg4[%c105] : memref<144xf32, #tpu.memory_space<smem>>
    %889 = vector.broadcast %888 : f32 to vector<8x128xf32>
    %890 = arith.mulf %889, %879 : vector<8x128xf32>
    %891 = arith.addf %870, %890 : vector<8x128xf32>
    %c141 = arith.constant 141 : index
    %892 = memref.load %arg4[%c141] : memref<144xf32, #tpu.memory_space<smem>>
    %893 = vector.broadcast %892 : f32 to vector<8x128xf32>
    %894 = arith.mulf %893, %879 : vector<8x128xf32>
    %895 = arith.addf %874, %894 : vector<8x128xf32>
    %c7_i32_168 = arith.constant 7 : i32
    %896 = tpu.dynamic_rotate %759 by %c7_i32_168 dim 0 : vector<8x128xf32>, i32 -> vector<8x128xf32>
    %cst_169 = arith.constant 0.000000e+00 : f32
    %897 = vector.broadcast %cst_169 : f32 to vector<8x128xf32>
    %898 = arith.select %5, %896, %897 : vector<8x128xi1>, vector<8x128xf32>
    %c34_170 = arith.constant 34 : index
    %899 = memref.load %arg4[%c34_170] : memref<144xf32, #tpu.memory_space<smem>>
    %900 = vector.broadcast %899 : f32 to vector<8x128xf32>
    %901 = arith.mulf %900, %898 : vector<8x128xf32>
    %902 = arith.addf %883, %901 : vector<8x128xf32>
    %c70 = arith.constant 70 : index
    %903 = memref.load %arg4[%c70] : memref<144xf32, #tpu.memory_space<smem>>
    %904 = vector.broadcast %903 : f32 to vector<8x128xf32>
    %905 = arith.mulf %904, %898 : vector<8x128xf32>
    %906 = arith.addf %887, %905 : vector<8x128xf32>
    %c106 = arith.constant 106 : index
    %907 = memref.load %arg4[%c106] : memref<144xf32, #tpu.memory_space<smem>>
    %908 = vector.broadcast %907 : f32 to vector<8x128xf32>
    %909 = arith.mulf %908, %898 : vector<8x128xf32>
    %910 = arith.addf %891, %909 : vector<8x128xf32>
    %c142 = arith.constant 142 : index
    %911 = memref.load %arg4[%c142] : memref<144xf32, #tpu.memory_space<smem>>
    %912 = vector.broadcast %911 : f32 to vector<8x128xf32>
    %913 = arith.mulf %912, %898 : vector<8x128xf32>
    %914 = arith.addf %895, %913 : vector<8x128xf32>
    %c7_i32_171 = arith.constant 7 : i32
    %915 = tpu.dynamic_rotate %759 by %c7_i32_171 dim 0 : vector<8x128xf32>, i32 -> vector<8x128xf32>
    %c127_i32_172 = arith.constant 127 : i32
    %916 = tpu.dynamic_rotate %915 by %c127_i32_172 dim 1 : vector<8x128xf32>, i32 -> vector<8x128xf32>
    %917 = arith.andi %5, %9 : vector<8x128xi1>
    %cst_173 = arith.constant 0.000000e+00 : f32
    %918 = vector.broadcast %cst_173 : f32 to vector<8x128xf32>
    %919 = arith.select %917, %916, %918 : vector<8x128xi1>, vector<8x128xf32>
    %c35_174 = arith.constant 35 : index
    %920 = memref.load %arg4[%c35_174] : memref<144xf32, #tpu.memory_space<smem>>
    %921 = vector.broadcast %920 : f32 to vector<8x128xf32>
    %922 = arith.mulf %921, %919 : vector<8x128xf32>
    %923 = arith.addf %902, %922 : vector<8x128xf32>
    %c71 = arith.constant 71 : index
    %924 = memref.load %arg4[%c71] : memref<144xf32, #tpu.memory_space<smem>>
    %925 = vector.broadcast %924 : f32 to vector<8x128xf32>
    %926 = arith.mulf %925, %919 : vector<8x128xf32>
    %927 = arith.addf %906, %926 : vector<8x128xf32>
    %c107 = arith.constant 107 : index
    %928 = memref.load %arg4[%c107] : memref<144xf32, #tpu.memory_space<smem>>
    %929 = vector.broadcast %928 : f32 to vector<8x128xf32>
    %930 = arith.mulf %929, %919 : vector<8x128xf32>
    %931 = arith.addf %910, %930 : vector<8x128xf32>
    %c143 = arith.constant 143 : index
    %932 = memref.load %arg4[%c143] : memref<144xf32, #tpu.memory_space<smem>>
    %933 = vector.broadcast %932 : f32 to vector<8x128xf32>
    %934 = arith.mulf %933, %919 : vector<8x128xf32>
    %935 = arith.addf %914, %934 : vector<8x128xf32>
    %cst_175 = arith.constant 0.000000e+00 : f32
    %936 = vector.broadcast %cst_175 : f32 to vector<8x128xf32>
    %937 = arith.maximumf %923, %936 : vector<8x128xf32>
    %c0_176 = arith.constant 0 : index
    %c0_177 = arith.constant 0 : index
    %c0_178 = arith.constant 0 : index
    %938 = vector.load %arg6[%c0_176, %c0_177, %c0_178] : memref<1x8x512xf32, #tpu.memory_space<vmem>>, vector<1x8x128xf32>
    %939 = vector.shape_cast %938 : vector<1x8x128xf32> to vector<8x128xf32>
    %940 = vector.shape_cast %937 : vector<8x128xf32> to vector<1x8x128xf32>
    tpu.vector_store %arg6[%c0_176, %c0_177, %c0_178], %940 {strides = array<i32>} : memref<1x8x512xf32, #tpu.memory_space<vmem>>, vector<1x8x128xf32>,
    %cst_179 = arith.constant 0.000000e+00 : f32
    %941 = vector.broadcast %cst_179 : f32 to vector<8x128xf32>
    %942 = arith.maximumf %927, %941 : vector<8x128xf32>
    %c0_180 = arith.constant 0 : index
    %c0_181 = arith.constant 0 : index
    %c128_182 = arith.constant 128 : index
    %943 = vector.load %arg6[%c0_180, %c0_181, %c128_182] : memref<1x8x512xf32, #tpu.memory_space<vmem>>, vector<1x8x128xf32>
    %944 = vector.shape_cast %943 : vector<1x8x128xf32> to vector<8x128xf32>
    %945 = vector.shape_cast %942 : vector<8x128xf32> to vector<1x8x128xf32>
    tpu.vector_store %arg6[%c0_180, %c0_181, %c128_182], %945 {strides = array<i32>} : memref<1x8x512xf32, #tpu.memory_space<vmem>>, vector<1x8x128xf32>,
    %cst_183 = arith.constant 0.000000e+00 : f32
    %946 = vector.broadcast %cst_183 : f32 to vector<8x128xf32>
    %947 = arith.maximumf %931, %946 : vector<8x128xf32>
    %c0_184 = arith.constant 0 : index
    %c0_185 = arith.constant 0 : index
    %c256 = arith.constant 256 : index
    %948 = vector.load %arg6[%c0_184, %c0_185, %c256] : memref<1x8x512xf32, #tpu.memory_space<vmem>>, vector<1x8x128xf32>
    %949 = vector.shape_cast %948 : vector<1x8x128xf32> to vector<8x128xf32>
    %950 = vector.shape_cast %947 : vector<8x128xf32> to vector<1x8x128xf32>
    tpu.vector_store %arg6[%c0_184, %c0_185, %c256], %950 {strides = array<i32>} : memref<1x8x512xf32, #tpu.memory_space<vmem>>, vector<1x8x128xf32>,
    %cst_186 = arith.constant 0.000000e+00 : f32
    %951 = vector.broadcast %cst_186 : f32 to vector<8x128xf32>
    %952 = arith.maximumf %935, %951 : vector<8x128xf32>
    %c0_187 = arith.constant 0 : index
    %c0_188 = arith.constant 0 : index
    %c384 = arith.constant 384 : index
    %953 = vector.load %arg6[%c0_187, %c0_188, %c384] : memref<1x8x512xf32, #tpu.memory_space<vmem>>, vector<1x8x128xf32>
    %954 = vector.shape_cast %953 : vector<1x8x128xf32> to vector<8x128xf32>
    %955 = vector.shape_cast %952 : vector<8x128xf32> to vector<1x8x128xf32>
    tpu.vector_store %arg6[%c0_187, %c0_188, %c384], %955 {strides = array<i32>} : memref<1x8x512xf32, #tpu.memory_space<vmem>>, vector<1x8x128xf32>,
    return
  }
  func.func @transform_0(%arg0: i32) -> (i32, i32, i32) {
    %c0_i32 = arith.constant 0 : i32
    %c0_i32_0 = arith.constant 0 : i32
    %c0_i32_1 = arith.constant 0 : i32
    return %arg0, %c0_i32, %c0_i32_0 : i32, i32, i32
  }
  func.func @transform_1(%arg0: i32) -> i32 {
    %c0_i32 = arith.constant 0 : i32
    %c0_i32_0 = arith.constant 0 : i32
    return %c0_i32 : i32
  }
  func.func @transform_2(%arg0: i32) -> i32 {
    %c0_i32 = arith.constant 0 : i32
    %c0_i32_0 = arith.constant 0 : i32
    return %c0_i32 : i32
  }
  func.func @transform_3(%arg0: i32) -> i32 {
    %c0_i32 = arith.constant 0 : i32
    %c0_i32_0 = arith.constant 0 : i32
    return %c0_i32 : i32
  }
  func.func @transform_4(%arg0: i32) -> i32 {
    %c0_i32 = arith.constant 0 : i32
    %c0_i32_0 = arith.constant 0 : i32
    return %c0_i32 : i32
  }
  func.func @transform_5(%arg0: i32) -> (i32, i32, i32) {
    %c0_i32 = arith.constant 0 : i32
    %c0_i32_0 = arith.constant 0 : i32
    %c0_i32_1 = arith.constant 0 : i32
    return %arg0, %c0_i32, %c0_i32_0 : i32, i32, i32
  }
}

</mosaic_0001>

<llo_original>
// kernel: tpu_custom_call.1
$region0: #{tpu_custom_call.1}
  #allocation0 [shape = 'u32[]', space=smem, size = 0x4, offset = 0x4, fixed_abs, tag = 'smem constant byte address 0x4 - core index']
  #allocation1 [shape = 'u32[144,128]{1,0:T(1,128)}', space=vmem, size = 0x12000, scoped, tag = 'internal scratch']
  #allocation2 [shape = 'f32[4,8,128]{2,1,0:T(8,128)}', space=vmem, size = 0x4000, scoped, tag = 'scratch operand']
  %s0 = inlined_call_operand.hbm [shape: f32[2,8,128], index: 0, kind: input, shape index: {}]
  %s1 = inlined_call_operand.vmem [shape: f32[36], index: 1, kind: input, shape index: {}]
  %s2 = inlined_call_operand.vmem [shape: f32[4], index: 2, kind: input, shape index: {}]
  %s3 = inlined_call_operand.vmem [shape: f32[144], index: 3, kind: input, shape index: {}]
  %s4 = inlined_call_operand.vmem [shape: f32[4], index: 4, kind: input, shape index: {}]
  %s5 = inlined_call_operand.hbm [shape: f32[2,8,512], index: 5, kind: output, shape index: {}]
  %s6 = sld [smem:[#allocation0]]
  $region73: #{tpu_custom_call.1} parent=0
    _
  %s8 = ssub.s32 1, %s6
  %s9 = scalar_select 0, %s8, %s6
  $region1: #{tpu_custom_call.1} parent=0
    #allocation3 [shape = 'u8[8192]{0}', space=vmem, size = 0x2000, scoped, tag = 'input window, operand 0']
    #allocation4 [shape = 's32[2]{0}', space=sflag, size = 0x8, scoped, tag = 'scoped memory for tpu_custom_call.1']
    #allocation5 [shape = 's32[2]{0}', space=sflag, size = 0x8, scoped, tag = 'scoped memory for tpu_custom_call.1']
    #allocation6 [shape = 's32[2]{0}', space=sflag, size = 0x8, scoped, tag = 'scoped memory for tpu_custom_call.1']
    #allocation7 [shape = 'u8[512]{0}', space=smem, size = 0x200, scoped, tag = 'input window, operand 1, single buffered']
    #allocation8 [shape = 'u8[512]{0}', space=smem, size = 0x200, scoped, tag = 'input window, operand 2, single buffered']
    #allocation9 [shape = 's32[1]{0}', space=sflag, size = 0x4, scoped, tag = 'scoped memory for tpu_custom_call.1']
    #allocation10 [shape = 'u8[1024]{0}', space=smem, size = 0x400, scoped, tag = 'input window, operand 3, single buffered']
    #allocation11 [shape = 'u8[512]{0}', space=smem, size = 0x200, scoped, tag = 'input window, operand 4, single buffered']
    #allocation12 [shape = 's32[1]{0}', space=sflag, size = 0x4, scoped, tag = 'scoped memory for tpu_custom_call.1']
    #allocation13 [shape = 'u8[32768]{0}', space=vmem, size = 0x8000, scoped, tag = 'output window, operand 0']
    %10 = vsyncpa [#allocation4], 0
    %s11 = scalar_lea.sflag [#allocation4], 1
    %12 = vsyncpa %s11, 0
    %13 = vsyncpa [#allocation6], 0
    %14 = vsyncpa [#allocation9], 0
    %15 = vsyncpa [#allocation12], 0
    %16 = vsyncpa [#allocation5], 0
    %s17 = scalar_lea.sflag [#allocation5], 1
    %18 = vsyncpa %s17, 0
    loop: start=0, step=1, limit=4
    $region2: #{tpu_custom_call.1} parent=1 // loop_pre_header
      _
    $region3: #{tpu_custom_call.1} parent=1 // loop_header
      %s20 = sphi 0, %s24
      %p21 = scmp.ge.s32.totalorder %s20, 4
      %s30 = sphi 0, %s32
      %s33 = sphi 0, %s30
      %s34 = sphi 0, %s33
      %s50 = sphi 0, %s34
      %s54 = sphi 0, %s54
      %s56 = sphi 0, %s54
      %s57 = sphi 0, %s56
      %s71 = sphi 0, %s57
      %s75 = sphi 0, %s75
      %s77 = sphi 0, %s75
      %s78 = sphi 0, %s77
      %s92 = sphi 0, %s78
      %s96 = sphi 0, %s96
      %s98 = sphi 0, %s96
      %s99 = sphi 0, %s98
      %s113 = sphi 0, %s99
      %s117 = sphi 0, %s117
      %s119 = sphi 0, %s117
      %s120 = sphi 0, %s119
      %s134 = sphi 0, %s120
      %s140 = sphi 0, %s142
      %s143 = sphi 0, %s140
      %s144 = sphi 0, %s143
      %s160 = sphi 0, %s144
    $region4: #{tpu_custom_call.1} parent=1 // loop_header_branch
      %23 = sbr.rel (%p21) target = $region8
    $region5: #{tpu_custom_call.1} parent=1 // loop_body
      %s25 = ssub.s32 %s20, 1
      %s26 = ssub.s32 %s20, 2
      %s27 = sadd.s32 %s20, 1
      %s28 = ssub.s32 %s20, %s27
      %p29 = scmp.eq.s32.totalorder %s28, 0
      %s31 = sadd.s32 %s30, 1
      %s32 = scalar_select %p29, %s30, %s31
      %p35 = pneg %p29
      %p36 = scmp.eq.s32.totalorder %s20, 1
      %p37 = por %p35, %p36
      %p38 = scmp.ne.s32.totalorder %s30, %s33
      %p39 = scmp.eq.s32.totalorder %s20, 0
      %p40 = por %p38, %p39
      %p41 = scmp.ne.s32.totalorder %s30, %s33
      %p42 = scmp.eq.s32.totalorder %s25, 1
      %p43 = por %p41, %p42
      %p44 = scmp.ne.s32.totalorder %s33, %s34
      %p45 = scmp.eq.s32.totalorder %s25, 0
      %p46 = por %p44, %p45
      %p47 = scmp.ne.s32.totalorder %s33, %s34
      %p48 = scmp.eq.s32.totalorder %s26, 1
      %p49 = por %p47, %p48
      %p51 = scmp.ne.s32.totalorder %s34, %s50
      %p52 = scmp.eq.s32.totalorder %s26, 0
      %p53 = por %p51, %p52
      %s55 = sadd.s32 %s54, 1
      %p58 = scmp.eq.s32.totalorder %s20, 1
      %p59 = scmp.ne.s32.totalorder %s54, %s56
      %p60 = scmp.eq.s32.totalorder %s20, 0
      %p61 = por %p59, %p60
      %p62 = scmp.ne.s32.totalorder %s54, %s56
      %p63 = scmp.eq.s32.totalorder %s25, 1
      %p64 = por %p62, %p63
      %p65 = scmp.ne.s32.totalorder %s56, %s57
      %p66 = scmp.eq.s32.totalorder %s25, 0
      %p67 = por %p65, %p66
      %p68 = scmp.ne.s32.totalorder %s56, %s57
      %p69 = scmp.eq.s32.totalorder %s26, 1
      %p70 = por %p68, %p69
      %p72 = scmp.ne.s32.totalorder %s57, %s71
      %p73 = scmp.eq.s32.totalorder %s26, 0
      %p74 = por %p72, %p73
      %s76 = sadd.s32 %s75, 1
      %p79 = scmp.eq.s32.totalorder %s20, 1
      %p80 = scmp.ne.s32.totalorder %s75, %s77
      %p81 = scmp.eq.s32.totalorder %s20, 0
      %p82 = por %p80, %p81
      %p83 = scmp.ne.s32.totalorder %s75, %s77
      %p84 = scmp.eq.s32.totalorder %s25, 1
      %p85 = por %p83, %p84
      %p86 = scmp.ne.s32.totalorder %s77, %s78
      %p87 = scmp.eq.s32.totalorder %s25, 0
      %p88 = por %p86, %p87
      %p89 = scmp.ne.s32.totalorder %s77, %s78
      %p90 = scmp.eq.s32.totalorder %s26, 1
      %p91 = por %p89, %p90
      %p93 = scmp.ne.s32.totalorder %s78, %s92
      %p94 = scmp.eq.s32.totalorder %s26, 0
      %p95 = por %p93, %p94
      %s97 = sadd.s32 %s96, 1
      %p100 = scmp.eq.s32.totalorder %s20, 1
      %p101 = scmp.ne.s32.totalorder %s96, %s98
      %p102 = scmp.eq.s32.totalorder %s20, 0
      %p103 = por %p101, %p102
      %p104 = scmp.ne.s32.totalorder %s96, %s98
      %p105 = scmp.eq.s32.totalorder %s25, 1
      %p106 = por %p104, %p105
      %p107 = scmp.ne.s32.totalorder %s98, %s99
      %p108 = scmp.eq.s32.totalorder %s25, 0
      %p109 = por %p107, %p108
      %p110 = scmp.ne.s32.totalorder %s98, %s99
      %p111 = scmp.eq.s32.totalorder %s26, 1
      %p112 = por %p110, %p111
      %p114 = scmp.ne.s32.totalorder %s99, %s113
      %p115 = scmp.eq.s32.totalorder %s26, 0
      %p116 = por %p114, %p115
      %s118 = sadd.s32 %s117, 1
      %p121 = scmp.eq.s32.totalorder %s20, 1
      %p122 = scmp.ne.s32.totalorder %s117, %s119
      %p123 = scmp.eq.s32.totalorder %s20, 0
      %p124 = por %p122, %p123
      %p125 = scmp.ne.s32.totalorder %s117, %s119
      %p126 = scmp.eq.s32.totalorder %s25, 1
      %p127 = por %p125, %p126
      %p128 = scmp.ne.s32.totalorder %s119, %s120
      %p129 = scmp.eq.s32.totalorder %s25, 0
      %p130 = por %p128, %p129
      %p131 = scmp.ne.s32.totalorder %s119, %s120
      %p132 = scmp.eq.s32.totalorder %s26, 1
      %p133 = por %p131, %p132
      %p135 = scmp.ne.s32.totalorder %s120, %s134
      %p136 = scmp.eq.s32.totalorder %s26, 0
      %p137 = por %p135, %p136
      %s138 = ssub.s32 %s20, %s27
      %p139 = scmp.eq.s32.totalorder %s138, 0
      %s141 = sadd.s32 %s140, 1
      %s142 = scalar_select %p139, %s140, %s141
      %p145 = pneg %p139
      %p146 = scmp.eq.s32.totalorder %s20, 1
      %p147 = por %p145, %p146
      %p148 = scmp.ne.s32.totalorder %s140, %s143
      %p149 = scmp.eq.s32.totalorder %s20, 0
      %p150 = por %p148, %p149
      %p151 = scmp.ne.s32.totalorder %s140, %s143
      %p152 = scmp.eq.s32.totalorder %s25, 1
      %p153 = por %p151, %p152
      %p154 = scmp.ne.s32.totalorder %s143, %s144
      %p155 = scmp.eq.s32.totalorder %s25, 0
      %p156 = por %p154, %p155
      %p157 = scmp.ne.s32.totalorder %s143, %s144
      %p158 = scmp.eq.s32.totalorder %s26, 1
      %p159 = por %p157, %p158
      %p161 = scmp.ne.s32.totalorder %s144, %s160
      %p162 = scmp.eq.s32.totalorder %s26, 0
      %p163 = por %p161, %p162
      %p164 = scmp.le.s32.totalorder 1, %s20
      %p165 = scmp.lt.s32.totalorder %s20, 3
      %p166 = pnand %p164, %p165
      %p167 = pneg %p166
      // Predicated region
      $region9: #{tpu_custom_call.1} parent=5 // pred_check
        _
      $region10: #{tpu_custom_call.1} parent=5 // pred_check_branch
        %169 = sbr.rel (%p166) target = $region12
      $region11: #{tpu_custom_call.1} parent=5 // pred_region
        %s170 = ssub.s32 %s20, 1
        // Predicated region
        $region13: #{tpu_custom_call.1} parent=11 // pred_check
          %p171 = pneg %p67
        $region14: #{tpu_custom_call.1} parent=11 // pred_check_branch
          %173 = sbr.rel (%p171) target = $region16
        $region15: #{tpu_custom_call.1} parent=11 // pred_region
          %s175 = ssub.s32 16, 16
          %176 = vsyncadd [#allocation6], %s175
          %s178 = sshll.u32 %s1, 4
          %s179 = int_to_ptr.vmem [resolvable:$true] %s178
          %181 = dma.vmem_to_smem %s179, 16, [#allocation7], [#allocation6]
        $region16: #{tpu_custom_call.1} parent=11 // pred_fallthru
          _
        // Predicated region
        $region17: #{tpu_custom_call.1} parent=11 // pred_check
          %p182 = pneg %p88
        $region18: #{tpu_custom_call.1} parent=11 // pred_check_branch
          %184 = sbr.rel (%p182) target = $region20
        $region19: #{tpu_custom_call.1} parent=11 // pred_region
          %s186 = ssub.s32 16, 16
          %187 = vsyncadd [#allocation9], %s186
          %s189 = sshll.u32 %s2, 4
          %s190 = int_to_ptr.vmem [resolvable:$true] %s189
          %192 = dma.vmem_to_smem %s190, 16, [#allocation8], [#allocation9]
        $region20: #{tpu_custom_call.1} parent=11 // pred_fallthru
          _
        // Predicated region
        $region21: #{tpu_custom_call.1} parent=11 // pred_check
          %p193 = pneg %p109
        $region22: #{tpu_custom_call.1} parent=11 // pred_check_branch
          %195 = sbr.rel (%p193) target = $region24
        $region23: #{tpu_custom_call.1} parent=11 // pred_region
          %s197 = ssub.s32 32, 32
          %198 = vsyncadd [#allocation9], %s197
          %s200 = sshll.u32 %s3, 4
          %s201 = int_to_ptr.vmem [resolvable:$true] %s200
          %203 = dma.vmem_to_smem %s201, 32, [#allocation10], [#allocation9]
        $region24: #{tpu_custom_call.1} parent=11 // pred_fallthru
          _
        // Predicated region
        $region25: #{tpu_custom_call.1} parent=11 // pred_check
          %p204 = pneg %p130
        $region26: #{tpu_custom_call.1} parent=11 // pred_check_branch
          %206 = sbr.rel (%p204) target = $region28
        $region27: #{tpu_custom_call.1} parent=11 // pred_region
          %s208 = ssub.s32 16, 16
          %209 = vsyncadd [#allocation12], %s208
          %s211 = sshll.u32 %s4, 4
          %s212 = int_to_ptr.vmem [resolvable:$true] %s211
          %214 = dma.vmem_to_smem %s212, 16, [#allocation11], [#allocation12]
        $region28: #{tpu_custom_call.1} parent=11 // pred_fallthru
          _
      $region12: #{tpu_custom_call.1} parent=5 // pred_fallthru
        _
      %p215 = scmp.lt.s32.totalorder %s20, 2
      // Predicated region
      $region29: #{tpu_custom_call.1} parent=5 // pred_check
        %p216 = pneg %p215
      $region30: #{tpu_custom_call.1} parent=5 // pred_check_branch
        %218 = sbr.rel (%p216) target = $region32
      $region31: #{tpu_custom_call.1} parent=5 // pred_region
        // Predicated region
        $region33: #{tpu_custom_call.1} parent=31 // pred_check
          %p219 = pneg %p40
        $region34: #{tpu_custom_call.1} parent=31 // pred_check_branch
          %221 = sbr.rel (%p219) target = $region36
        $region35: #{tpu_custom_call.1} parent=31 // pred_region
          %s222 = sand.u32 %s30, 1
          %s223 = scalar_lea.sflag [#allocation4], %s222
          %s224 = sand.u32 %s30, 1
          %s225 = smul.addr %s224, 8
          %s226 = scalar_lea.vmem [#allocation3], %s225
          %s228 = ssub.s32 128, 128
          %229 = vsyncadd %s223, %s228
          %s230 = smul.addr %s20, 128
          %s231 = scalar_lea.hbm %s0, %s230
          %s233 = sshll.u32 %s226, 4
          %s234 = int_to_ptr.vmem [resolvable:$true] %s233
          %236 = dma.hbm_to_vmem [thread:$0]  %s231, 128, %s234, %s223
        $region36: #{tpu_custom_call.1} parent=31 // pred_fallthru
          _
      $region32: #{tpu_custom_call.1} parent=5 // pred_fallthru
        _
      %p237 = scmp.le.s32.totalorder 1, %s20
      %p238 = scmp.lt.s32.totalorder %s20, 3
      %p239 = pnand %p237, %p238
      %p240 = pneg %p239
      // Predicated region
      $region37: #{tpu_custom_call.1} parent=5 // pred_check
        _
      $region38: #{tpu_custom_call.1} parent=5 // pred_check_branch
        %242 = sbr.rel (%p239) target = $region40
      $region39: #{tpu_custom_call.1} parent=5 // pred_region
        %s243 = ssub.s32 %s20, 1
        %s244 = sand.u32 %s33, 1
        %s245 = scalar_lea.sflag [#allocation4], %s244
        %s246 = sand.u32 %s33, 1
        %s247 = smul.addr %s246, 8
        %s248 = scalar_lea.vmem [#allocation3], %s247
        // Predicated region
        $region41: #{tpu_custom_call.1} parent=39 // pred_check
          %p249 = pneg %p46
        $region42: #{tpu_custom_call.1} parent=39 // pred_check_branch
          %251 = sbr.rel (%p249) target = $region44
        $region43: #{tpu_custom_call.1} parent=39 // pred_region
          %252 = dma.done %s245, 128
        $region44: #{tpu_custom_call.1} parent=39 // pred_fallthru
          _
        // Predicated region
        $region45: #{tpu_custom_call.1} parent=39 // pred_check
          %p253 = pneg %p67
        $region46: #{tpu_custom_call.1} parent=39 // pred_check_branch
          %255 = sbr.rel (%p253) target = $region48
        $region47: #{tpu_custom_call.1} parent=39 // pred_region
          %256 = dma.done [#allocation6], 16
        $region48: #{tpu_custom_call.1} parent=39 // pred_fallthru
          _
        // Predicated region
        $region49: #{tpu_custom_call.1} parent=39 // pred_check
          %p257 = pneg %p88
        $region50: #{tpu_custom_call.1} parent=39 // pred_check_branch
          %259 = sbr.rel (%p257) target = $region52
        $region51: #{tpu_custom_call.1} parent=39 // pred_region
          %260 = dma.done [#allocation9], 16
        $region52: #{tpu_custom_call.1} parent=39 // pred_fallthru
          _
        // Predicated region
        $region53: #{tpu_custom_call.1} parent=39 // pred_check
          %p261 = pneg %p109
        $region54: #{tpu_custom_call.1} parent=39 // pred_check_branch
          %263 = sbr.rel (%p261) target = $region56
        $region55: #{tpu_custom_call.1} parent=39 // pred_region
          %264 = dma.done [#allocation9], 32
        $region56: #{tpu_custom_call.1} parent=39 // pred_fallthru
          _
        // Predicated region
        $region57: #{tpu_custom_call.1} parent=39 // pred_check
          %p265 = pneg %p130
        $region58: #{tpu_custom_call.1} parent=39 // pred_check_branch
          %267 = sbr.rel (%p265) target = $region60
        $region59: #{tpu_custom_call.1} parent=39 // pred_region
          %268 = dma.done [#allocation12], 16
        $region60: #{tpu_custom_call.1} parent=39 // pred_fallthru
          _
        %269 = sfence
        %s270 = sand.u32 %s33, 1
        %s271 = scalar_lea.sflag [#allocation4], %s270
        %s272 = sand.u32 %s33, 1
        %s273 = smul.addr %s272, 8
        %s274 = scalar_lea.vmem [#allocation3], %s273
        %p275 = pneg %p46
        %p276 = pneg %p43
        %p277 = pneg %p67
        %p278 = pneg %p64
        %p279 = pneg %p88
        %p280 = pneg %p85
        %p281 = pneg %p109
        %p282 = pneg %p106
        %p283 = pneg %p130
        %p284 = pneg %p127
        %p285 = pneg %p156
        %p286 = pneg %p153
        %s287 = sand.u32 %s143, 1
        %s288 = scalar_lea.sflag [#allocation5], %s287
        %s289 = sand.u32 %s143, 1
        %s290 = smul.addr %s289, 32
        %s291 = scalar_lea.vmem [#allocation13], %s290
        %v292 = vlaneseq
        %v293 = vshrl.u32 %v292, 7
        %v294 = vlaneseq
        %v295 = vand.u32 %v294, 127
        %vm296 = vcmp.ge.s32.totalorder %v293, 1
        %vm297 = vcmp.lt.s32.totalorder %v293, 7
        %vm298 = vcmp.ge.s32.totalorder %v295, 1
        %vm299 = vcmp.lt.s32.totalorder %v295, 127
        %v300 = vld [vmem:[%s248] sm:$0xff]
        %s301 = sld [smem:[#allocation8]]
        %v302 = vstv %s301
        %s303 = sld [smem:[#allocation8 + $0x1]]
        %v304 = vstv %s303
        %s305 = sld [smem:[#allocation8 + $0x2]]
        %v306 = vstv %s305
        %s307 = sld [smem:[#allocation8 + $0x3]]
        %v308 = vstv %s307
        %v309 = vrot.slane %v300, 7
        %310 = vrot.lane.b32.xlu0 %v309, 1
        %v311 = vpop.permute.xlu0 %310
        %vm312 = vmand %vm296, %vm298
        %v313 = vsel %vm312, %v311, 0.0
        %s314 = sld [smem:[#allocation7]]
        %v315 = vstv %s314
        %v316 = vmul.f32 %v315, %v313
        %v317 = vadd.f32 %v302, %v316
        %s318 = sld [smem:[#allocation7 + $0x9]]
        %v319 = vstv %s318
        %v320 = vmul.f32 %v319, %v313
        %v321 = vadd.f32 %v304, %v320
        %s322 = sld [smem:[#allocation7 + $0x12]]
        %v323 = vstv %s322
        %v324 = vmul.f32 %v323, %v313
        %v325 = vadd.f32 %v306, %v324
        %s326 = sld [smem:[#allocation7 + $0x1b]]
        %v327 = vstv %s326
        %v328 = vmul.f32 %v327, %v313
        %v329 = vadd.f32 %v308, %v328
        %v330 = vsel %vm296, %v309, 0.0
        %s331 = sld [smem:[#allocation7 + $0x1]]
        %v332 = vstv %s331
        %v333 = vmul.f32 %v332, %v330
        %v334 = vadd.f32 %v317, %v333
        %s335 = sld [smem:[#allocation7 + $0xa]]
        %v336 = vstv %s335
        %v337 = vmul.f32 %v336, %v330
        %v338 = vadd.f32 %v321, %v337
        %s339 = sld [smem:[#allocation7 + $0x13]]
        %v340 = vstv %s339
        %v341 = vmul.f32 %v340, %v330
        %v342 = vadd.f32 %v325, %v341
        %s343 = sld [smem:[#allocation7 + $0x1c]]
        %v344 = vstv %s343
        %v345 = vmul.f32 %v344, %v330
        %v346 = vadd.f32 %v329, %v345
        %347 = vrot.lane.b32.xlu0 %v309, 127
        %v348 = vpop.permute.xlu0 %347
        %vm349 = vmand %vm296, %vm299
        %v350 = vsel %vm349, %v348, 0.0
        %s351 = sld [smem:[#allocation7 + $0x2]]
        %v352 = vstv %s351
        %v353 = vmul.f32 %v352, %v350
        %v354 = vadd.f32 %v334, %v353
        %s355 = sld [smem:[#allocation7 + $0xb]]
        %v356 = vstv %s355
        %v357 = vmul.f32 %v356, %v350
        %v358 = vadd.f32 %v338, %v357
        %s359 = sld [smem:[#allocation7 + $0x14]]
        %v360 = vstv %s359
        %v361 = vmul.f32 %v360, %v350
        %v362 = vadd.f32 %v342, %v361
        %s363 = sld [smem:[#allocation7 + $0x1d]]
        %v364 = vstv %s363
        %v365 = vmul.f32 %v364, %v350
        %v366 = vadd.f32 %v346, %v365
        %367 = vrot.lane.b32.xlu0 %v300, 1
        %v368 = vpop.permute.xlu0 %367
        %v369 = vsel %vm298, %v368, 0.0
        %s370 = sld [smem:[#allocation7 + $0x3]]
        %v371 = vstv %s370
        %v372 = vmul.f32 %v371, %v369
        %v373 = vadd.f32 %v354, %v372
        %s374 = sld [smem:[#allocation7 + $0xc]]
        %v375 = vstv %s374
        %v376 = vmul.f32 %v375, %v369
        %v377 = vadd.f32 %v358, %v376
        %s378 = sld [smem:[#allocation7 + $0x15]]
        %v379 = vstv %s378
        %v380 = vmul.f32 %v379, %v369
        %v381 = vadd.f32 %v362, %v380
        %s382 = sld [smem:[#allocation7 + $0x1e]]
        %v383 = vstv %s382
        %v384 = vmul.f32 %v383, %v369
        %v385 = vadd.f32 %v366, %v384
        %s386 = sld [smem:[#allocation7 + $0x4]]
        %v387 = vstv %s386
        %v388 = vmul.f32 %v387, %v300
        %v389 = vadd.f32 %v373, %v388
        %s390 = sld [smem:[#allocation7 + $0xd]]
        %v391 = vstv %s390
        %v392 = vmul.f32 %v391, %v300
        %v393 = vadd.f32 %v377, %v392
        %s394 = sld [smem:[#allocation7 + $0x16]]
        %v395 = vstv %s394
        %v396 = vmul.f32 %v395, %v300
        %v397 = vadd.f32 %v381, %v396
        %s398 = sld [smem:[#allocation7 + $0x1f]]
        %v399 = vstv %s398
        %v400 = vmul.f32 %v399, %v300
        %v401 = vadd.f32 %v385, %v400
        %402 = vrot.lane.b32.xlu0 %v300, 127
        %v403 = vpop.permute.xlu0 %402
        %v404 = vsel %vm299, %v403, 0.0
        %s405 = sld [smem:[#allocation7 + $0x5]]
        %v406 = vstv %s405
        %v407 = vmul.f32 %v406, %v404
        %v408 = vadd.f32 %v389, %v407
        %s409 = sld [smem:[#allocation7 + $0xe]]
        %v410 = vstv %s409
        %v411 = vmul.f32 %v410, %v404
        %v412 = vadd.f32 %v393, %v411
        %s413 = sld [smem:[#allocation7 + $0x17]]
        %v414 = vstv %s413
        %v415 = vmul.f32 %v414, %v404
        %v416 = vadd.f32 %v397, %v415
        %s417 = sld [smem:[#allocation7 + $0x20]]
        %v418 = vstv %s417
        %v419 = vmul.f32 %v418, %v404
        %v420 = vadd.f32 %v401, %v419
        %v421 = vrot.slane %v300, 1
        %422 = vrot.lane.b32.xlu0 %v421, 1
        %v423 = vpop.permute.xlu0 %422
        %vm424 = vmand %vm297, %vm298
        %v425 = vsel %vm424, %v423, 0.0
        %s426 = sld [smem:[#allocation7 + $0x6]]
        %v427 = vstv %s426
        %v428 = vmul.f32 %v427, %v425
        %v429 = vadd.f32 %v408, %v428
        %s430 = sld [smem:[#allocation7 + $0xf]]
        %v431 = vstv %s430
        %v432 = vmul.f32 %v431, %v425
        %v433 = vadd.f32 %v412, %v432
        %s434 = sld [smem:[#allocation7 + $0x18]]
        %v435 = vstv %s434
        %v436 = vmul.f32 %v435, %v425
        %v437 = vadd.f32 %v416, %v436
        %s438 = sld [smem:[#allocation7 + $0x21]]
        %v439 = vstv %s438
        %v440 = vmul.f32 %v439, %v425
        %v441 = vadd.f32 %v420, %v440
        %v442 = vsel %vm297, %v421, 0.0
        %s443 = sld [smem:[#allocation7 + $0x7]]
        %v444 = vstv %s443
        %v445 = vmul.f32 %v444, %v442
        %v446 = vadd.f32 %v429, %v445
        %s447 = sld [smem:[#allocation7 + $0x10]]
        %v448 = vstv %s447
        %v449 = vmul.f32 %v448, %v442
        %v450 = vadd.f32 %v433, %v449
        %s451 = sld [smem:[#allocation7 + $0x19]]
        %v452 = vstv %s451
        %v453 = vmul.f32 %v452, %v442
        %v454 = vadd.f32 %v437, %v453
        %s455 = sld [smem:[#allocation7 + $0x22]]
        %v456 = vstv %s455
        %v457 = vmul.f32 %v456, %v442
        %v458 = vadd.f32 %v441, %v457
        %459 = vrot.lane.b32.xlu0 %v421, 127
        %v460 = vpop.permute.xlu0 %459
        %vm461 = vmand %vm297, %vm299
        %v462 = vsel %vm461, %v460, 0.0
        %s463 = sld [smem:[#allocation7 + $0x8]]
        %v464 = vstv %s463
        %v465 = vmul.f32 %v464, %v462
        %v466 = vadd.f32 %v446, %v465
        %s467 = sld [smem:[#allocation7 + $0x11]]
        %v468 = vstv %s467
        %v469 = vmul.f32 %v468, %v462
        %v470 = vadd.f32 %v450, %v469
        %s471 = sld [smem:[#allocation7 + $0x1a]]
        %v472 = vstv %s471
        %v473 = vmul.f32 %v472, %v462
        %v474 = vadd.f32 %v454, %v473
        %s475 = sld [smem:[#allocation7 + $0x23]]
        %v476 = vstv %s475
        %v477 = vmul.f32 %v476, %v462
        %v478 = vadd.f32 %v458, %v477
        %v479 = vmax.f32 %v466, 0.0
        %480 = vst [vmem:[#allocation2] sm:$0xff] %v479
        %v481 = vmax.f32 %v470, 0.0
        %s482 = scalar_lea.vmem [#allocation2], 8
        %483 = vst [vmem:[%s482] sm:$0xff] %v481
        %v484 = vmax.f32 %v474, 0.0
        %s485 = scalar_lea.vmem [#allocation2], 16
        %486 = vst [vmem:[%s485] sm:$0xff] %v484
        %v487 = vmax.f32 %v478, 0.0
        %s488 = scalar_lea.vmem [#allocation2], 24
        %489 = vst [vmem:[%s488] sm:$0xff] %v487
        %s490 = sld [smem:[#allocation11]]
        %v491 = vstv %s490
        %s492 = sld [smem:[#allocation11 + $0x1]]
        %v493 = vstv %s492
        %s494 = sld [smem:[#allocation11 + $0x2]]
        %v495 = vstv %s494
        %s496 = sld [smem:[#allocation11 + $0x3]]
        %v497 = vstv %s496
        %v498 = vld [vmem:[#allocation2] sm:$0xff]
        %v499 = vrot.slane %v498, 7
        %500 = vrot.lane.b32.xlu0 %v499, 1
        %v501 = vpop.permute.xlu0 %500
        %v502 = vsel %vm312, %v501, 0.0
        %s503 = sld [smem:[#allocation10]]
        %v504 = vstv %s503
        %v505 = vmul.f32 %v504, %v502
        %v506 = vadd.f32 %v491, %v505
        %s507 = sld [smem:[#allocation10 + $0x24]]
        %v508 = vstv %s507
        %v509 = vmul.f32 %v508, %v502
        %v510 = vadd.f32 %v493, %v509
        %s511 = sld [smem:[#allocation10 + $0x48]]
        %v512 = vstv %s511
        %v513 = vmul.f32 %v512, %v502
        %v514 = vadd.f32 %v495, %v513
        %s515 = sld [smem:[#allocation10 + $0x6c]]
        %v516 = vstv %s515
        %v517 = vmul.f32 %v516, %v502
        %v518 = vadd.f32 %v497, %v517
        %v519 = vsel %vm296, %v499, 0.0
        %s520 = sld [smem:[#allocation10 + $0x1]]
        %v521 = vstv %s520
        %v522 = vmul.f32 %v521, %v519
        %v523 = vadd.f32 %v506, %v522
        %s524 = sld [smem:[#allocation10 + $0x25]]
        %v525 = vstv %s524
        %v526 = vmul.f32 %v525, %v519
        %v527 = vadd.f32 %v510, %v526
        %s528 = sld [smem:[#allocation10 + $0x49]]
        %v529 = vstv %s528
        %v530 = vmul.f32 %v529, %v519
        %v531 = vadd.f32 %v514, %v530
        %s532 = sld [smem:[#allocation10 + $0x6d]]
        %v533 = vstv %s532
        %v534 = vmul.f32 %v533, %v519
        %v535 = vadd.f32 %v518, %v534
        %536 = vrot.lane.b32.xlu0 %v499, 127
        %v537 = vpop.permute.xlu0 %536
        %v538 = vsel %vm349, %v537, 0.0
        %s539 = sld [smem:[#allocation10 + $0x2]]
        %v540 = vstv %s539
        %v541 = vmul.f32 %v540, %v538
        %v542 = vadd.f32 %v523, %v541
        %s543 = sld [smem:[#allocation10 + $0x26]]
        %v544 = vstv %s543
        %v545 = vmul.f32 %v544, %v538
        %v546 = vadd.f32 %v527, %v545
        %s547 = sld [smem:[#allocation10 + $0x4a]]
        %v548 = vstv %s547
        %v549 = vmul.f32 %v548, %v538
        %v550 = vadd.f32 %v531, %v549
        %s551 = sld [smem:[#allocation10 + $0x6e]]
        %v552 = vstv %s551
        %v553 = vmul.f32 %v552, %v538
        %v554 = vadd.f32 %v535, %v553
        %555 = vrot.lane.b32.xlu0 %v498, 1
        %v556 = vpop.permute.xlu0 %555
        %v557 = vsel %vm298, %v556, 0.0
        %s558 = sld [smem:[#allocation10 + $0x3]]
        %v559 = vstv %s558
        %v560 = vmul.f32 %v559, %v557
        %v561 = vadd.f32 %v542, %v560
        %s562 = sld [smem:[#allocation10 + $0x27]]
        %v563 = vstv %s562
        %v564 = vmul.f32 %v563, %v557
        %v565 = vadd.f32 %v546, %v564
        %s566 = sld [smem:[#allocation10 + $0x4b]]
        %v567 = vstv %s566
        %v568 = vmul.f32 %v567, %v557
        %v569 = vadd.f32 %v550, %v568
        %s570 = sld [smem:[#allocation10 + $0x6f]]
        %v571 = vstv %s570
        %v572 = vmul.f32 %v571, %v557
        %v573 = vadd.f32 %v554, %v572
        %s574 = sld [smem:[#allocation10 + $0x4]]
        %v575 = vstv %s574
        %v576 = vmul.f32 %v575, %v498
        %v577 = vadd.f32 %v561, %v576
        %s578 = sld [smem:[#allocation10 + $0x28]]
        %v579 = vstv %s578
        %v580 = vmul.f32 %v579, %v498
        %v581 = vadd.f32 %v565, %v580
        %s582 = sld [smem:[#allocation10 + $0x4c]]
        %v583 = vstv %s582
        %v584 = vmul.f32 %v583, %v498
        %v585 = vadd.f32 %v569, %v584
        %s586 = sld [smem:[#allocation10 + $0x70]]
        %v587 = vstv %s586
        %v588 = vmul.f32 %v587, %v498
        %v589 = vadd.f32 %v573, %v588
        %590 = vrot.lane.b32.xlu0 %v498, 127
        %v591 = vpop.permute.xlu0 %590
        %v592 = vsel %vm299, %v591, 0.0
        %s593 = sld [smem:[#allocation10 + $0x5]]
        %v594 = vstv %s593
        %v595 = vmul.f32 %v594, %v592
        %v596 = vadd.f32 %v577, %v595
        %s597 = sld [smem:[#allocation10 + $0x29]]
        %v598 = vstv %s597
        %v599 = vmul.f32 %v598, %v592
        %v600 = vadd.f32 %v581, %v599
        %s601 = sld [smem:[#allocation10 + $0x4d]]
        %v602 = vstv %s601
        %v603 = vmul.f32 %v602, %v592
        %v604 = vadd.f32 %v585, %v603
        %s605 = sld [smem:[#allocation10 + $0x71]]
        %v606 = vstv %s605
        %v607 = vmul.f32 %v606, %v592
        %v608 = vadd.f32 %v589, %v607
        %v609 = vrot.slane %v498, 1
        %610 = vrot.lane.b32.xlu0 %v609, 1
        %v611 = vpop.permute.xlu0 %610
        %v612 = vsel %vm424, %v611, 0.0
        %s613 = sld [smem:[#allocation10 + $0x6]]
        %v614 = vstv %s613
        %v615 = vmul.f32 %v614, %v612
        %v616 = vadd.f32 %v596, %v615
        %s617 = sld [smem:[#allocation10 + $0x2a]]
        %v618 = vstv %s617
        %v619 = vmul.f32 %v618, %v612
        %v620 = vadd.f32 %v600, %v619
        %s621 = sld [smem:[#allocation10 + $0x4e]]
        %v622 = vstv %s621
        %v623 = vmul.f32 %v622, %v612
        %v624 = vadd.f32 %v604, %v623
        %s625 = sld [smem:[#allocation10 + $0x72]]
        %v626 = vstv %s625
        %v627 = vmul.f32 %v626, %v612
        %v628 = vadd.f32 %v608, %v627
        %v629 = vsel %vm297, %v609, 0.0
        %s630 = sld [smem:[#allocation10 + $0x7]]
        %v631 = vstv %s630
        %v632 = vmul.f32 %v631, %v629
        %v633 = vadd.f32 %v616, %v632
        %s634 = sld [smem:[#allocation10 + $0x2b]]
        %v635 = vstv %s634
        %v636 = vmul.f32 %v635, %v629
        %v637 = vadd.f32 %v620, %v636
        %s638 = sld [smem:[#allocation10 + $0x4f]]
        %v639 = vstv %s638
        %v640 = vmul.f32 %v639, %v629
        %v641 = vadd.f32 %v624, %v640
        %s642 = sld [smem:[#allocation10 + $0x73]]
        %v643 = vstv %s642
        %v644 = vmul.f32 %v643, %v629
        %v645 = vadd.f32 %v628, %v644
        %646 = vrot.lane.b32.xlu0 %v609, 127
        %v647 = vpop.permute.xlu0 %646
        %v648 = vsel %vm461, %v647, 0.0
        %s649 = sld [smem:[#allocation10 + $0x8]]
        %v650 = vstv %s649
        %v651 = vmul.f32 %v650, %v648
        %v652 = vadd.f32 %v633, %v651
        %s653 = sld [smem:[#allocation10 + $0x2c]]
        %v654 = vstv %s653
        %v655 = vmul.f32 %v654, %v648
        %v656 = vadd.f32 %v637, %v655
        %s657 = sld [smem:[#allocation10 + $0x50]]
        %v658 = vstv %s657
        %v659 = vmul.f32 %v658, %v648
        %v660 = vadd.f32 %v641, %v659
        %s661 = sld [smem:[#allocation10 + $0x74]]
        %v662 = vstv %s661
        %v663 = vmul.f32 %v662, %v648
        %v664 = vadd.f32 %v645, %v663
        %v665 = vld [vmem:[%s482] sm:$0xff]
        %v666 = vrot.slane %v665, 7
        %667 = vrot.lane.b32.xlu0 %v666, 1
        %v668 = vpop.permute.xlu0 %667
        %v669 = vsel %vm312, %v668, 0.0
        %s670 = sld [smem:[#allocation10 + $0x9]]
        %v671 = vstv %s670
        %v672 = vmul.f32 %v671, %v669
        %v673 = vadd.f32 %v652, %v672
        %s674 = sld [smem:[#allocation10 + $0x2d]]
        %v675 = vstv %s674
        %v676 = vmul.f32 %v675, %v669
        %v677 = vadd.f32 %v656, %v676
        %s678 = sld [smem:[#allocation10 + $0x51]]
        %v679 = vstv %s678
        %v680 = vmul.f32 %v679, %v669
        %v681 = vadd.f32 %v660, %v680
        %s682 = sld [smem:[#allocation10 + $0x75]]
        %v683 = vstv %s682
        %v684 = vmul.f32 %v683, %v669
        %v685 = vadd.f32 %v664, %v684
        %v686 = vsel %vm296, %v666, 0.0
        %s687 = sld [smem:[#allocation10 + $0xa]]
        %v688 = vstv %s687
        %v689 = vmul.f32 %v688, %v686
        %v690 = vadd.f32 %v673, %v689
        %s691 = sld [smem:[#allocation10 + $0x2e]]
        %v692 = vstv %s691
        %v693 = vmul.f32 %v692, %v686
        %v694 = vadd.f32 %v677, %v693
        %s695 = sld [smem:[#allocation10 + $0x52]]
        %v696 = vstv %s695
        %v697 = vmul.f32 %v696, %v686
        %v698 = vadd.f32 %v681, %v697
        %s699 = sld [smem:[#allocation10 + $0x76]]
        %v700 = vstv %s699
        %v701 = vmul.f32 %v700, %v686
        %v702 = vadd.f32 %v685, %v701
        %703 = vrot.lane.b32.xlu0 %v666, 127
        %v704 = vpop.permute.xlu0 %703
        %v705 = vsel %vm349, %v704, 0.0
        %s706 = sld [smem:[#allocation10 + $0xb]]
        %v707 = vstv %s706
        %v708 = vmul.f32 %v707, %v705
        %v709 = vadd.f32 %v690, %v708
        %s710 = sld [smem:[#allocation10 + $0x2f]]
        %v711 = vstv %s710
        %v712 = vmul.f32 %v711, %v705
        %v713 = vadd.f32 %v694, %v712
        %s714 = sld [smem:[#allocation10 + $0x53]]
        %v715 = vstv %s714
        %v716 = vmul.f32 %v715, %v705
        %v717 = vadd.f32 %v698, %v716
        %s718 = sld [smem:[#allocation10 + $0x77]]
        %v719 = vstv %s718
        %v720 = vmul.f32 %v719, %v705
        %v721 = vadd.f32 %v702, %v720
        %722 = vrot.lane.b32.xlu0 %v665, 1
        %v723 = vpop.permute.xlu0 %722
        %v724 = vsel %vm298, %v723, 0.0
        %s725 = sld [smem:[#allocation10 + $0xc]]
        %v726 = vstv %s725
        %v727 = vmul.f32 %v726, %v724
        %v728 = vadd.f32 %v709, %v727
        %s729 = sld [smem:[#allocation10 + $0x30]]
        %v730 = vstv %s729
        %v731 = vmul.f32 %v730, %v724
        %v732 = vadd.f32 %v713, %v731
        %s733 = sld [smem:[#allocation10 + $0x54]]
        %v734 = vstv %s733
        %v735 = vmul.f32 %v734, %v724
        %v736 = vadd.f32 %v717, %v735
        %s737 = sld [smem:[#allocation10 + $0x78]]
        %v738 = vstv %s737
        %v739 = vmul.f32 %v738, %v724
        %v740 = vadd.f32 %v721, %v739
        %s741 = sld [smem:[#allocation10 + $0xd]]
        %v742 = vstv %s741
        %v743 = vmul.f32 %v742, %v665
        %v744 = vadd.f32 %v728, %v743
        %s745 = sld [smem:[#allocation10 + $0x31]]
        %v746 = vstv %s745
        %v747 = vmul.f32 %v746, %v665
        %v748 = vadd.f32 %v732, %v747
        %s749 = sld [smem:[#allocation10 + $0x55]]
        %v750 = vstv %s749
        %v751 = vmul.f32 %v750, %v665
        %v752 = vadd.f32 %v736, %v751
        %s753 = sld [smem:[#allocation10 + $0x79]]
        %v754 = vstv %s753
        %v755 = vmul.f32 %v754, %v665
        %v756 = vadd.f32 %v740, %v755
        %757 = vrot.lane.b32.xlu0 %v665, 127
        %v758 = vpop.permute.xlu0 %757
        %v759 = vsel %vm299, %v758, 0.0
        %s760 = sld [smem:[#allocation10 + $0xe]]
        %v761 = vstv %s760
        %v762 = vmul.f32 %v761, %v759
        %v763 = vadd.f32 %v744, %v762
        %s764 = sld [smem:[#allocation10 + $0x32]]
        %v765 = vstv %s764
        %v766 = vmul.f32 %v765, %v759
        %v767 = vadd.f32 %v748, %v766
        %s768 = sld [smem:[#allocation10 + $0x56]]
        %v769 = vstv %s768
        %v770 = vmul.f32 %v769, %v759
        %v771 = vadd.f32 %v752, %v770
        %s772 = sld [smem:[#allocation10 + $0x7a]]
        %v773 = vstv %s772
        %v774 = vmul.f32 %v773, %v759
        %v775 = vadd.f32 %v756, %v774
        %v776 = vrot.slane %v665, 1
        %777 = vrot.lane.b32.xlu0 %v776, 1
        %v778 = vpop.permute.xlu0 %777
        %v779 = vsel %vm424, %v778, 0.0
        %s780 = sld [smem:[#allocation10 + $0xf]]
        %v781 = vstv %s780
        %v782 = vmul.f32 %v781, %v779
        %v783 = vadd.f32 %v763, %v782
        %s784 = sld [smem:[#allocation10 + $0x33]]
        %v785 = vstv %s784
        %v786 = vmul.f32 %v785, %v779
        %v787 = vadd.f32 %v767, %v786
        %s788 = sld [smem:[#allocation10 + $0x57]]
        %v789 = vstv %s788
        %v790 = vmul.f32 %v789, %v779
        %v791 = vadd.f32 %v771, %v790
        %s792 = sld [smem:[#allocation10 + $0x7b]]
        %v793 = vstv %s792
        %v794 = vmul.f32 %v793, %v779
        %v795 = vadd.f32 %v775, %v794
        %v796 = vsel %vm297, %v776, 0.0
        %s797 = sld [smem:[#allocation10 + $0x10]]
        %v798 = vstv %s797
        %v799 = vmul.f32 %v798, %v796
        %v800 = vadd.f32 %v783, %v799
        %s801 = sld [smem:[#allocation10 + $0x34]]
        %v802 = vstv %s801
        %v803 = vmul.f32 %v802, %v796
        %v804 = vadd.f32 %v787, %v803
        %s805 = sld [smem:[#allocation10 + $0x58]]
        %v806 = vstv %s805
        %v807 = vmul.f32 %v806, %v796
        %v808 = vadd.f32 %v791, %v807
        %s809 = sld [smem:[#allocation10 + $0x7c]]
        %v810 = vstv %s809
        %v811 = vmul.f32 %v810, %v796
        %v812 = vadd.f32 %v795, %v811
        %813 = vrot.lane.b32.xlu0 %v776, 127
        %v814 = vpop.permute.xlu0 %813
        %v815 = vsel %vm461, %v814, 0.0
        %s816 = sld [smem:[#allocation10 + $0x11]]
        %v817 = vstv %s816
        %v818 = vmul.f32 %v817, %v815
        %v819 = vadd.f32 %v800, %v818
        %s820 = sld [smem:[#allocation10 + $0x35]]
        %v821 = vstv %s820
        %v822 = vmul.f32 %v821, %v815
        %v823 = vadd.f32 %v804, %v822
        %s824 = sld [smem:[#allocation10 + $0x59]]
        %v825 = vstv %s824
        %v826 = vmul.f32 %v825, %v815
        %v827 = vadd.f32 %v808, %v826
        %s828 = sld [smem:[#allocation10 + $0x7d]]
        %v829 = vstv %s828
        %v830 = vmul.f32 %v829, %v815
        %v831 = vadd.f32 %v812, %v830
        %v832 = vld [vmem:[%s485] sm:$0xff]
        %v833 = vrot.slane %v832, 7
        %834 = vrot.lane.b32.xlu0 %v833, 1
        %v835 = vpop.permute.xlu0 %834
        %v836 = vsel %vm312, %v835, 0.0
        %s837 = sld [smem:[#allocation10 + $0x12]]
        %v838 = vstv %s837
        %v839 = vmul.f32 %v838, %v836
        %v840 = vadd.f32 %v819, %v839
        %s841 = sld [smem:[#allocation10 + $0x36]]
        %v842 = vstv %s841
        %v843 = vmul.f32 %v842, %v836
        %v844 = vadd.f32 %v823, %v843
        %s845 = sld [smem:[#allocation10 + $0x5a]]
        %v846 = vstv %s845
        %v847 = vmul.f32 %v846, %v836
        %v848 = vadd.f32 %v827, %v847
        %s849 = sld [smem:[#allocation10 + $0x7e]]
        %v850 = vstv %s849
        %v851 = vmul.f32 %v850, %v836
        %v852 = vadd.f32 %v831, %v851
        %v853 = vsel %vm296, %v833, 0.0
        %s854 = sld [smem:[#allocation10 + $0x13]]
        %v855 = vstv %s854
        %v856 = vmul.f32 %v855, %v853
        %v857 = vadd.f32 %v840, %v856
        %s858 = sld [smem:[#allocation10 + $0x37]]
        %v859 = vstv %s858
        %v860 = vmul.f32 %v859, %v853
        %v861 = vadd.f32 %v844, %v860
        %s862 = sld [smem:[#allocation10 + $0x5b]]
        %v863 = vstv %s862
        %v864 = vmul.f32 %v863, %v853
        %v865 = vadd.f32 %v848, %v864
        %s866 = sld [smem:[#allocation10 + $0x7f]]
        %v867 = vstv %s866
        %v868 = vmul.f32 %v867, %v853
        %v869 = vadd.f32 %v852, %v868
        %870 = vrot.lane.b32.xlu0 %v833, 127
        %v871 = vpop.permute.xlu0 %870
        %v872 = vsel %vm349, %v871, 0.0
        %s873 = sld [smem:[#allocation10 + $0x14]]
        %v874 = vstv %s873
        %v875 = vmul.f32 %v874, %v872
        %v876 = vadd.f32 %v857, %v875
        %s877 = sld [smem:[#allocation10 + $0x38]]
        %v878 = vstv %s877
        %v879 = vmul.f32 %v878, %v872
        %v880 = vadd.f32 %v861, %v879
        %s881 = sld [smem:[#allocation10 + $0x5c]]
        %v882 = vstv %s881
        %v883 = vmul.f32 %v882, %v872
        %v884 = vadd.f32 %v865, %v883
        %s885 = sld [smem:[#allocation10 + $0x80]]
        %v886 = vstv %s885
        %v887 = vmul.f32 %v886, %v872
        %v888 = vadd.f32 %v869, %v887
        %889 = vrot.lane.b32.xlu0 %v832, 1
        %v890 = vpop.permute.xlu0 %889
        %v891 = vsel %vm298, %v890, 0.0
        %s892 = sld [smem:[#allocation10 + $0x15]]
        %v893 = vstv %s892
        %v894 = vmul.f32 %v893, %v891
        %v895 = vadd.f32 %v876, %v894
        %s896 = sld [smem:[#allocation10 + $0x39]]
        %v897 = vstv %s896
        %v898 = vmul.f32 %v897, %v891
        %v899 = vadd.f32 %v880, %v898
        %s900 = sld [smem:[#allocation10 + $0x5d]]
        %v901 = vstv %s900
        %v902 = vmul.f32 %v901, %v891
        %v903 = vadd.f32 %v884, %v902
        %s904 = sld [smem:[#allocation10 + $0x81]]
        %v905 = vstv %s904
        %v906 = vmul.f32 %v905, %v891
        %v907 = vadd.f32 %v888, %v906
        %s908 = sld [smem:[#allocation10 + $0x16]]
        %v909 = vstv %s908
        %v910 = vmul.f32 %v909, %v832
        %v911 = vadd.f32 %v895, %v910
        %s912 = sld [smem:[#allocation10 + $0x3a]]
        %v913 = vstv %s912
        %v914 = vmul.f32 %v913, %v832
        %v915 = vadd.f32 %v899, %v914
        %s916 = sld [smem:[#allocation10 + $0x5e]]
        %v917 = vstv %s916
        %v918 = vmul.f32 %v917, %v832
        %v919 = vadd.f32 %v903, %v918
        %s920 = sld [smem:[#allocation10 + $0x82]]
        %v921 = vstv %s920
        %v922 = vmul.f32 %v921, %v832
        %v923 = vadd.f32 %v907, %v922
        %924 = vrot.lane.b32.xlu0 %v832, 127
        %v925 = vpop.permute.xlu0 %924
        %v926 = vsel %vm299, %v925, 0.0
        %s927 = sld [smem:[#allocation10 + $0x17]]
        %v928 = vstv %s927
        %v929 = vmul.f32 %v928, %v926
        %v930 = vadd.f32 %v911, %v929
        %s931 = sld [smem:[#allocation10 + $0x3b]]
        %v932 = vstv %s931
        %v933 = vmul.f32 %v932, %v926
        %v934 = vadd.f32 %v915, %v933
        %s935 = sld [smem:[#allocation10 + $0x5f]]
        %v936 = vstv %s935
        %v937 = vmul.f32 %v936, %v926
        %v938 = vadd.f32 %v919, %v937
        %s939 = sld [smem:[#allocation10 + $0x83]]
        %v940 = vstv %s939
        %v941 = vmul.f32 %v940, %v926
        %v942 = vadd.f32 %v923, %v941
        %v943 = vrot.slane %v832, 1
        %944 = vrot.lane.b32.xlu0 %v943, 1
        %v945 = vpop.permute.xlu0 %944
        %v946 = vsel %vm424, %v945, 0.0
        %s947 = sld [smem:[#allocation10 + $0x18]]
        %v948 = vstv %s947
        %v949 = vmul.f32 %v948, %v946
        %v950 = vadd.f32 %v930, %v949
        %s951 = sld [smem:[#allocation10 + $0x3c]]
        %v952 = vstv %s951
        %v953 = vmul.f32 %v952, %v946
        %v954 = vadd.f32 %v934, %v953
        %s955 = sld [smem:[#allocation10 + $0x60]]
        %v956 = vstv %s955
        %v957 = vmul.f32 %v956, %v946
        %v958 = vadd.f32 %v938, %v957
        %s959 = sld [smem:[#allocation10 + $0x84]]
        %v960 = vstv %s959
        %v961 = vmul.f32 %v960, %v946
        %v962 = vadd.f32 %v942, %v961
        %v963 = vsel %vm297, %v943, 0.0
        %s964 = sld [smem:[#allocation10 + $0x19]]
        %v965 = vstv %s964
        %v966 = vmul.f32 %v965, %v963
        %v967 = vadd.f32 %v950, %v966
        %s968 = sld [smem:[#allocation10 + $0x3d]]
        %v969 = vstv %s968
        %v970 = vmul.f32 %v969, %v963
        %v971 = vadd.f32 %v954, %v970
        %s972 = sld [smem:[#allocation10 + $0x61]]
        %v973 = vstv %s972
        %v974 = vmul.f32 %v973, %v963
        %v975 = vadd.f32 %v958, %v974
        %s976 = sld [smem:[#allocation10 + $0x85]]
        %v977 = vstv %s976
        %v978 = vmul.f32 %v977, %v963
        %v979 = vadd.f32 %v962, %v978
        %980 = vrot.lane.b32.xlu0 %v943, 127
        %v981 = vpop.permute.xlu0 %980
        %v982 = vsel %vm461, %v981, 0.0
        %s983 = sld [smem:[#allocation10 + $0x1a]]
        %v984 = vstv %s983
        %v985 = vmul.f32 %v984, %v982
        %v986 = vadd.f32 %v967, %v985
        %s987 = sld [smem:[#allocation10 + $0x3e]]
        %v988 = vstv %s987
        %v989 = vmul.f32 %v988, %v982
        %v990 = vadd.f32 %v971, %v989
        %s991 = sld [smem:[#allocation10 + $0x62]]
        %v992 = vstv %s991
        %v993 = vmul.f32 %v992, %v982
        %v994 = vadd.f32 %v975, %v993
        %s995 = sld [smem:[#allocation10 + $0x86]]
        %v996 = vstv %s995
        %v997 = vmul.f32 %v996, %v982
        %v998 = vadd.f32 %v979, %v997
        %v999 = vld [vmem:[%s488] sm:$0xff]
        %v1000 = vrot.slane %v999, 7
        %1001 = vrot.lane.b32.xlu0 %v1000, 1
        %v1002 = vpop.permute.xlu0 %1001
        %v1003 = vsel %vm312, %v1002, 0.0
        %s1004 = sld [smem:[#allocation10 + $0x1b]]
        %v1005 = vstv %s1004
        %v1006 = vmul.f32 %v1005, %v1003
        %v1007 = vadd.f32 %v986, %v1006
        %s1008 = sld [smem:[#allocation10 + $0x3f]]
        %v1009 = vstv %s1008
        %v1010 = vmul.f32 %v1009, %v1003
        %v1011 = vadd.f32 %v990, %v1010
        %s1012 = sld [smem:[#allocation10 + $0x63]]
        %v1013 = vstv %s1012
        %v1014 = vmul.f32 %v1013, %v1003
        %v1015 = vadd.f32 %v994, %v1014
        %s1016 = sld [smem:[#allocation10 + $0x87]]
        %v1017 = vstv %s1016
        %v1018 = vmul.f32 %v1017, %v1003
        %v1019 = vadd.f32 %v998, %v1018
        %v1020 = vsel %vm296, %v1000, 0.0
        %s1021 = sld [smem:[#allocation10 + $0x1c]]
        %v1022 = vstv %s1021
        %v1023 = vmul.f32 %v1022, %v1020
        %v1024 = vadd.f32 %v1007, %v1023
        %s1025 = sld [smem:[#allocation10 + $0x40]]
        %v1026 = vstv %s1025
        %v1027 = vmul.f32 %v1026, %v1020
        %v1028 = vadd.f32 %v1011, %v1027
        %s1029 = sld [smem:[#allocation10 + $0x64]]
        %v1030 = vstv %s1029
        %v1031 = vmul.f32 %v1030, %v1020
        %v1032 = vadd.f32 %v1015, %v1031
        %s1033 = sld [smem:[#allocation10 + $0x88]]
        %v1034 = vstv %s1033
        %v1035 = vmul.f32 %v1034, %v1020
        %v1036 = vadd.f32 %v1019, %v1035
        %1037 = vrot.lane.b32.xlu0 %v1000, 127
        %v1038 = vpop.permute.xlu0 %1037
        %v1039 = vsel %vm349, %v1038, 0.0
        %s1040 = sld [smem:[#allocation10 + $0x1d]]
        %v1041 = vstv %s1040
        %v1042 = vmul.f32 %v1041, %v1039
        %v1043 = vadd.f32 %v1024, %v1042
        %s1044 = sld [smem:[#allocation10 + $0x41]]
        %v1045 = vstv %s1044
        %v1046 = vmul.f32 %v1045, %v1039
        %v1047 = vadd.f32 %v1028, %v1046
        %s1048 = sld [smem:[#allocation10 + $0x65]]
        %v1049 = vstv %s1048
        %v1050 = vmul.f32 %v1049, %v1039
        %v1051 = vadd.f32 %v1032, %v1050
        %s1052 = sld [smem:[#allocation10 + $0x89]]
        %v1053 = vstv %s1052
        %v1054 = vmul.f32 %v1053, %v1039
        %v1055 = vadd.f32 %v1036, %v1054
        %1056 = vrot.lane.b32.xlu0 %v999, 1
        %v1057 = vpop.permute.xlu0 %1056
        %v1058 = vsel %vm298, %v1057, 0.0
        %s1059 = sld [smem:[#allocation10 + $0x1e]]
        %v1060 = vstv %s1059
        %v1061 = vmul.f32 %v1060, %v1058
        %v1062 = vadd.f32 %v1043, %v1061
        %s1063 = sld [smem:[#allocation10 + $0x42]]
        %v1064 = vstv %s1063
        %v1065 = vmul.f32 %v1064, %v1058
        %v1066 = vadd.f32 %v1047, %v1065
        %s1067 = sld [smem:[#allocation10 + $0x66]]
        %v1068 = vstv %s1067
        %v1069 = vmul.f32 %v1068, %v1058
        %v1070 = vadd.f32 %v1051, %v1069
        %s1071 = sld [smem:[#allocation10 + $0x8a]]
        %v1072 = vstv %s1071
        %v1073 = vmul.f32 %v1072, %v1058
        %v1074 = vadd.f32 %v1055, %v1073
        %s1075 = sld [smem:[#allocation10 + $0x1f]]
        %v1076 = vstv %s1075
        %v1077 = vmul.f32 %v1076, %v999
        %v1078 = vadd.f32 %v1062, %v1077
        %s1079 = sld [smem:[#allocation10 + $0x43]]
        %v1080 = vstv %s1079
        %v1081 = vmul.f32 %v1080, %v999
        %v1082 = vadd.f32 %v1066, %v1081
        %s1083 = sld [smem:[#allocation10 + $0x67]]
        %v1084 = vstv %s1083
        %v1085 = vmul.f32 %v1084, %v999
        %v1086 = vadd.f32 %v1070, %v1085
        %s1087 = sld [smem:[#allocation10 + $0x8b]]
        %v1088 = vstv %s1087
        %v1089 = vmul.f32 %v1088, %v999
        %v1090 = vadd.f32 %v1074, %v1089
        %1091 = vrot.lane.b32.xlu0 %v999, 127
        %v1092 = vpop.permute.xlu0 %1091
        %v1093 = vsel %vm299, %v1092, 0.0
        %s1094 = sld [smem:[#allocation10 + $0x20]]
        %v1095 = vstv %s1094
        %v1096 = vmul.f32 %v1095, %v1093
        %v1097 = vadd.f32 %v1078, %v1096
        %s1098 = sld [smem:[#allocation10 + $0x44]]
        %v1099 = vstv %s1098
        %v1100 = vmul.f32 %v1099, %v1093
        %v1101 = vadd.f32 %v1082, %v1100
        %s1102 = sld [smem:[#allocation10 + $0x68]]
        %v1103 = vstv %s1102
        %v1104 = vmul.f32 %v1103, %v1093
        %v1105 = vadd.f32 %v1086, %v1104
        %s1106 = sld [smem:[#allocation10 + $0x8c]]
        %v1107 = vstv %s1106
        %v1108 = vmul.f32 %v1107, %v1093
        %v1109 = vadd.f32 %v1090, %v1108
        %v1110 = vrot.slane %v999, 1
        %1111 = vrot.lane.b32.xlu0 %v1110, 1
        %v1112 = vpop.permute.xlu0 %1111
        %v1113 = vsel %vm424, %v1112, 0.0
        %s1114 = sld [smem:[#allocation10 + $0x21]]
        %v1115 = vstv %s1114
        %v1116 = vmul.f32 %v1115, %v1113
        %v1117 = vadd.f32 %v1097, %v1116
        %s1118 = sld [smem:[#allocation10 + $0x45]]
        %v1119 = vstv %s1118
        %v1120 = vmul.f32 %v1119, %v1113
        %v1121 = vadd.f32 %v1101, %v1120
        %s1122 = sld [smem:[#allocation10 + $0x69]]
        %v1123 = vstv %s1122
        %v1124 = vmul.f32 %v1123, %v1113
        %v1125 = vadd.f32 %v1105, %v1124
        %s1126 = sld [smem:[#allocation10 + $0x8d]]
        %v1127 = vstv %s1126
        %v1128 = vmul.f32 %v1127, %v1113
        %v1129 = vadd.f32 %v1109, %v1128
        %v1130 = vsel %vm297, %v1110, 0.0
        %s1131 = sld [smem:[#allocation10 + $0x22]]
        %v1132 = vstv %s1131
        %v1133 = vmul.f32 %v1132, %v1130
        %v1134 = vadd.f32 %v1117, %v1133
        %s1135 = sld [smem:[#allocation10 + $0x46]]
        %v1136 = vstv %s1135
        %v1137 = vmul.f32 %v1136, %v1130
        %v1138 = vadd.f32 %v1121, %v1137
        %s1139 = sld [smem:[#allocation10 + $0x6a]]
        %v1140 = vstv %s1139
        %v1141 = vmul.f32 %v1140, %v1130
        %v1142 = vadd.f32 %v1125, %v1141
        %s1143 = sld [smem:[#allocation10 + $0x8e]]
        %v1144 = vstv %s1143
        %v1145 = vmul.f32 %v1144, %v1130
        %v1146 = vadd.f32 %v1129, %v1145
        %1147 = vrot.lane.b32.xlu0 %v1110, 127
        %v1148 = vpop.permute.xlu0 %1147
        %v1149 = vsel %vm461, %v1148, 0.0
        %s1150 = sld [smem:[#allocation10 + $0x23]]
        %v1151 = vstv %s1150
        %v1152 = vmul.f32 %v1151, %v1149
        %v1153 = vadd.f32 %v1134, %v1152
        %s1154 = sld [smem:[#allocation10 + $0x47]]
        %v1155 = vstv %s1154
        %v1156 = vmul.f32 %v1155, %v1149
        %v1157 = vadd.f32 %v1138, %v1156
        %s1158 = sld [smem:[#allocation10 + $0x6b]]
        %v1159 = vstv %s1158
        %v1160 = vmul.f32 %v1159, %v1149
        %v1161 = vadd.f32 %v1142, %v1160
        %s1162 = sld [smem:[#allocation10 + $0x8f]]
        %v1163 = vstv %s1162
        %v1164 = vmul.f32 %v1163, %v1149
        %v1165 = vadd.f32 %v1146, %v1164
        %v1166 = vmax.f32 %v1153, 0.0
        %1167 = vst [vmem:[%s291] sm:$0xff] %v1166
        %v1168 = vmax.f32 %v1157, 0.0
        %1169 = vst [vmem:[%s291 + $0x8] sm:$0xff] %v1168
        %v1170 = vmax.f32 %v1161, 0.0
        %1171 = vst [vmem:[%s291 + $0x10] sm:$0xff] %v1170
        %v1172 = vmax.f32 %v1165, 0.0
        %1173 = vst [vmem:[%s291 + $0x18] sm:$0xff] %v1172
        %s1174 = sand.u32 %s143, 1
        %s1175 = scalar_lea.sflag [#allocation5], %s1174
        %s1176 = sand.u32 %s143, 1
        %s1177 = smul.addr %s1176, 32
        %s1178 = scalar_lea.vmem [#allocation13], %s1177
        // Predicated region
        $region61: #{tpu_custom_call.1} parent=39 // pred_check
          %p1179 = pneg %p153
        $region62: #{tpu_custom_call.1} parent=39 // pred_check_branch
          %1181 = sbr.rel (%p1179) target = $region64
        $region63: #{tpu_custom_call.1} parent=39 // pred_region
          %s1183 = ssub.s32 512, 512
          %1184 = vsyncadd %s1175, %s1183
          %s1185 = smul.addr %s25, 4
          %s1186 = smul.addr %s1185, 128
          %s1187 = scalar_lea.hbm %s5, %s1186
          %s1189 = sshll.u32 %s1178, 4
          %s1190 = int_to_ptr.vmem [resolvable:$true] %s1189
          %1192 = dma.vmem_to_hbm [thread:$0]  %s1190, 512, %s1187, %s1175
        $region64: #{tpu_custom_call.1} parent=39 // pred_fallthru
          _
      $region40: #{tpu_custom_call.1} parent=5 // pred_fallthru
        _
      %p1193 = scmp.le.s32.totalorder 2, %s20
      // Predicated region
      $region65: #{tpu_custom_call.1} parent=5 // pred_check
        %p1194 = pneg %p1193
      $region66: #{tpu_custom_call.1} parent=5 // pred_check_branch
        %1196 = sbr.rel (%p1194) target = $region68
      $region67: #{tpu_custom_call.1} parent=5 // pred_region
        %s1197 = ssub.s32 %s20, 2
        // Predicated region
        $region69: #{tpu_custom_call.1} parent=67 // pred_check
          %p1198 = pneg %p159
        $region70: #{tpu_custom_call.1} parent=67 // pred_check_branch
          %1200 = sbr.rel (%p1198) target = $region72
        $region71: #{tpu_custom_call.1} parent=67 // pred_region
          %s1201 = sand.u32 %s144, 1
          %s1202 = scalar_lea.sflag [#allocation5], %s1201
          %s1203 = sand.u32 %s144, 1
          %s1204 = smul.addr %s1203, 32
          %s1205 = scalar_lea.vmem [#allocation13], %s1204
          %1206 = dma.done %s1202, 512
        $region72: #{tpu_custom_call.1} parent=67 // pred_fallthru
          _
      $region68: #{tpu_custom_call.1} parent=5 // pred_fallthru
        _
    $region6: #{tpu_custom_call.1} parent=1 // loop_footer
      %s24 = sadd.s32 1, %s20
    $region7: #{tpu_custom_call.1} parent=1 // loop_footer_branch
      %19 = sbr.rel target = $region3
    $region8: #{tpu_custom_call.1} parent=1 // loop_exit
      _
    %1207 = vsyncpa [#allocation4], 1
    %s1208 = scalar_lea.sflag [#allocation4], 1
    %1209 = vsyncpa %s1208, 1
    %1210 = vsyncpa [#allocation5], 1
    %s1211 = scalar_lea.sflag [#allocation5], 1
    %1212 = vsyncpa %s1211, 1
    %1213 = vsyncpa [#allocation6], 1
    %s1214 = scalar_lea.sflag [#allocation6], 1
    %1215 = vsyncpa %s1214, 1
    %1216 = vsyncpa [#allocation9], 1
    %1217 = vsyncpa [#allocation12], 1

</llo_original>
